<compile_context>
chip_gen: v7x
topology: tpu7x:2x2x1
jax: 0.10.0
libtpu: 0.0.40
codegen_flags: <defaults>
</compile_context>

<pallas_src>
import functools

import jax
import jax.numpy as jnp
from jax import lax
from jax.experimental import pallas as pl
from jax.experimental.pallas import tpu as pltpu


NEG_SLOPE = 0.01
LANE = 128  # pad all feature dims to one full lane width


def _leaky_relu(x, slope):
    return jnp.where(x >= 0, x, slope * x)


def _round_up(v, m):
    return ((v + m - 1) // m) * m


def _pad2(a, rows, cols):
    r, c = a.shape
    return jnp.pad(a, ((0, rows - r), (0, cols - c)))


# ----------------------------------------------------------------------------
# One fused kernel: prep MLP -> all GINE conv layers -> post MLP
# ----------------------------------------------------------------------------
def fused_gine_kernel(x_ref, ew_ref, src_ref, dst_ref,
                      prep_w_ref, prep_b_ref,
                      lin_w_ref, lin_b_ref,
                      w1_ref, b1_ref, w2_ref, b2_ref,
                      post_w_ref, post_b_ref,
                      o_ref,
                      h_ref, hsrc_ref,
                      *, num_layers, num_edges, slope):
    f32 = jnp.float32
    bf16 = jnp.bfloat16
    lane = prep_w_ref.shape[1]

    def mm(a, w):
        # bf16 MXU matmul, f32 accumulation; weights are already bf16.
        return jnp.dot(a.astype(bf16), w, preferred_element_type=f32)

    # ---- prep MLP: Linear + LeakyReLU (Dropout = identity in eval) ----------
    h_ref[...] = _leaky_relu(mm(x_ref[...], prep_w_ref[...]) + prep_b_ref[...],
                             slope)

    # ---- dst scatter one-hot, built in-kernel, already oriented [N, E] ------
    # Padded dst entries are -1 -> all-zero column -> padded edges contribute 0.
    n_pad = o_ref.shape[0]
    e_pad = dst_ref.shape[1]
    row_ids = lax.broadcasted_iota(jnp.int32, (n_pad, e_pad), 0)
    g_dst = (row_ids == dst_ref[...]).astype(bf16)                  # [N, E]

    # ---- layer-invariant edge projection, hoisted: one wide matmul ----------
    e_proj_all = mm(ew_ref[...], lin_w_ref[...])                    # [E, L*128]

    # Zero the gather scratch once so padded edge rows stay finite (they are
    # killed by the all-zero one-hot columns in the scatter matmul anyway).
    hsrc_ref[...] = jnp.zeros_like(hsrc_ref)

    # ---- GINE conv layers (static unroll; everything stays in VMEM) ---------
    for l in range(num_layers):
        # Index-based gather of h rows at the source nodes (f32, no one-hot).
        def gather_body(e, carry):
            s = src_ref[e]
            hsrc_ref[pl.ds(e, 1), :] = h_ref[pl.ds(s, 1), :]
            return carry
        lax.fori_loop(0, num_edges, gather_body, 0)

        e_proj = e_proj_all[:, l * lane:(l + 1) * lane] + lin_b_ref[l]
        msg = jnp.maximum(hsrc_ref[...] + e_proj, 0.0)              # ReLU(x_j + e)
        # scatter-add at destination: [N, E] @ [E, F] on the MXU
        agg = jnp.dot(g_dst, msg.astype(bf16), preferred_element_type=f32)
        z = h_ref[...] + agg                                        # eps = 0
        h1 = _leaky_relu(mm(z, w1_ref[l]) + b1_ref[l], slope)
        h_ref[...] = jnp.tanh(mm(h1, w2_ref[l]) + b2_ref[l])

    # ---- post MLP: Linear + Tanh --------------------------------------------
    out = jnp.tanh(mm(h_ref[...], post_w_ref[...]) + post_b_ref[...])
    o_ref[...] = out.astype(o_ref.dtype)


def gine_encoder_pp_forward(packed, x, edge_index, edge_weight, *, slope=NEG_SLOPE):
    n = x.shape[0]
    e = edge_weight.shape[0]
    num_layers = packed["num_layers"]
    post_dim = packed["post_dim"]

    n_pad = _round_up(n, 8)
    e_pad = _round_up(e, LANE)

    # Lane/sublane padding is exact: padded feature columns stay zero through
    # every Linear / LeakyReLU / ReLU / Tanh; padded edges are killed by the
    # all-zero one-hot columns (dst = -1).
    x_pad = _pad2(x.astype(jnp.float32), n_pad, LANE)
    ew_pad = _pad2(edge_weight.astype(jnp.float32), e_pad, LANE)
    src = edge_index[0].astype(jnp.int32)                            # [E] -> SMEM
    dst = jnp.full((1, e_pad), -1, dtype=jnp.int32)
    dst = dst.at[0, :e].set(edge_index[1].astype(jnp.int32))         # [1, E_pad]

    args = (x_pad, ew_pad, src, dst,
            packed["prep_w"], packed["prep_b"],
            packed["lin_w"], packed["lin_b"],
            packed["w1"], packed["b1"], packed["w2"], packed["b2"],
            packed["post_w"], packed["post_b"])

    vmem = pltpu.MemorySpace.VMEM
    smem = pltpu.MemorySpace.SMEM
    in_specs = [
        pl.BlockSpec(memory_space=vmem),   # x_pad
        pl.BlockSpec(memory_space=vmem),   # ew_pad
        pl.BlockSpec(memory_space=smem),   # src indices (scalar reads in gather)
        pl.BlockSpec(memory_space=vmem),   # dst indices (vector iota-compare)
    ] + [pl.BlockSpec(memory_space=vmem)] * 10

    kernel = functools.partial(fused_gine_kernel,
                               num_layers=num_layers, num_edges=e, slope=slope)

    out_pad = pl.pallas_call(
        kernel,
        out_shape=jax.ShapeDtypeStruct((n_pad, LANE), jnp.float32),
        in_specs=in_specs,
        out_specs=pl.BlockSpec(memory_space=vmem),
        scratch_shapes=[
            pltpu.VMEM((n_pad, LANE), jnp.float32),   # h (node features)
            pltpu.VMEM((e_pad, LANE), jnp.float32),   # gathered h[src]
        ],
        compiler_params=pltpu.CompilerParams(
            # 32 MiB fits v7x's smaller (64 MiB) VMEM as well as v5e/v6e.
            vmem_limit_bytes=32 * 1024 * 1024),
    )(*args)

    return out_pad[:n, :post_dim]


# ----------------------------------------------------------------------------
# Parameters: raw (unpadded, f32) for the reference; packed (lane-padded,
# stacked / concatenated per layer, weights in bf16) for the kernel.
# ----------------------------------------------------------------------------
def init_raw_params(key, in_channels, edge_dim, prep_dim, gine_dims, post_dim):
    def lin(k, fi, fo):
        kw, kb = jax.random.split(k)
        w = jax.random.normal(kw, (fi, fo), dtype=jnp.float32) * 0.1
        b = jax.random.normal(kb, (fo,), dtype=jnp.float32) * 0.1
        return w, b

    nl = len(gine_dims)
    keys = jax.random.split(key, 2 + 3 * nl)
    raw = {}
    raw["prep_w"], raw["prep_b"] = lin(keys[0], in_channels, prep_dim)

    convs = []
    prev = prep_dim
    ki = 1
    for dims in gine_dims:
        lin_w, lin_b = lin(keys[ki], edge_dim, prev); ki += 1   # GINEConv edge lin
        w1, b1 = lin(keys[ki], prev, dims[0]); ki += 1
        w2, b2 = lin(keys[ki], dims[0], dims[1]); ki += 1
        convs.append(dict(lin_w=lin_w, lin_b=lin_b, w1=w1, b1=b1, w2=w2, b2=b2))
        prev = dims[1]
    raw["convs"] = convs

    raw["post_w"], raw["post_b"] = lin(keys[ki], prev, post_dim)
    return raw


def pack_params(raw, lane=LANE):
    def pw(w):   # pad weight to [lane, lane], cast to bf16 (MXU-native)
        return _pad2(w, lane, lane).astype(jnp.bfloat16)

    def pb(b):   # pad bias to [1, lane], keep f32 (elementwise math stays f32)
        return jnp.pad(b, (0, lane - b.shape[0])).reshape(1, lane).astype(jnp.float32)

    convs = raw["convs"]
    return dict(
        prep_w=pw(raw["prep_w"]), prep_b=pb(raw["prep_b"]),
        # edge projections of all layers concatenated along the output dim
        lin_w=jnp.concatenate([pw(c["lin_w"]) for c in convs], axis=1),
        lin_b=jnp.stack([pb(c["lin_b"]) for c in convs]),
        w1=jnp.stack([pw(c["w1"]) for c in convs]),
        b1=jnp.stack([pb(c["b1"]) for c in convs]),
        w2=jnp.stack([pw(c["w2"]) for c in convs]),
        b2=jnp.stack([pb(c["b2"]) for c in convs]),
        post_w=pw(raw["post_w"]), post_b=pb(raw["post_b"]),
        post_dim=raw["post_w"].shape[1],
        num_layers=len(convs),
    )


# Pure-JAX reference (f32, unpadded) for a correctness cross-check.
def reference_forward(raw, x, edge_index, edge_weight, slope=NEG_SLOPE):
    def lrelu(v):
        return jnp.where(v >= 0, v, slope * v)

    n = x.shape[0]
    src, dst = edge_index[0], edge_index[1]
    h = lrelu(x @ raw["prep_w"] + raw["prep_b"])
    for c in raw["convs"]:
        e_proj = edge_weight @ c["lin_w"] + c["lin_b"]
        msg = jnp.maximum(h[src] + e_proj, 0.0)
        agg = jnp.zeros((n, h.shape[1]), jnp.float32).at[dst].add(msg)
        z = h + agg
        h = jnp.tanh(lrelu(z @ c["w1"] + c["b1"]) @ c["w2"] + c["b2"])
    return jnp.tanh(h @ raw["post_w"] + raw["post_b"])


if __name__ == "__main__":
    # Module config: in_channels=4, edge_dim=2, layers_features_prep=[32],
    # gine_mlp_channels=[[32, 32], [32, 32]], layers_features_post=[16],
    # dropout=0.0 (identity), negative_slope=0.01
    N, E = 16, 32
    IN_CH, EDGE_DIM = 4, 2
    PREP, GINE, POST = 32, [[32, 32], [32, 32]], 16

    key = jax.random.PRNGKey(0)
    k_x, k_ei, k_ew, k_p = jax.random.split(key, 4)

    x = jax.random.normal(k_x, (N, IN_CH), dtype=jnp.float32)
    edge_index = jax.random.randint(k_ei, (2, E), 0, N, dtype=jnp.int32)
    edge_weight = jax.random.normal(k_ew, (E, EDGE_DIM), dtype=jnp.float32)

    raw = init_raw_params(k_p, IN_CH, EDGE_DIM, PREP, GINE, POST)
    packed = pack_params(raw)

    out = gine_encoder_pp_forward(packed, x, edge_index, edge_weight)
    out = jax.block_until_ready(out)

    assert out.shape == (N, POST)
    assert bool(jnp.all(jnp.isfinite(out)))

    # Cross-check against the f32 reference (loose tol: kernel matmuls run in
    # bf16 with f32 accumulation).
    ref = reference_forward(raw, x, edge_index, edge_weight)
    assert bool(jnp.max(jnp.abs(out - ref)) < 0.1)

    print("KERNEL_OK")
</pallas_src>

<mosaic_0001>
module attributes {stable_mosaic.version = 11 : i64} {
  func.func @fused_gine_kernel(%arg0: memref<16x128xf32, #tpu.memory_space<vmem>>, %arg1: memref<128x128xf32, #tpu.memory_space<vmem>>, %arg2: memref<32xi32, #tpu.memory_space<smem>>, %arg3: memref<1x128xi32, #tpu.memory_space<vmem>>, %arg4: memref<128x128xbf16, #tpu.memory_space<vmem>>, %arg5: memref<1x128xf32, #tpu.memory_space<vmem>>, %arg6: memref<128x256xbf16, #tpu.memory_space<vmem>>, %arg7: memref<2x1x128xf32, #tpu.memory_space<vmem>>, %arg8: memref<2x128x128xbf16, #tpu.memory_space<vmem>>, %arg9: memref<2x1x128xf32, #tpu.memory_space<vmem>>, %arg10: memref<2x128x128xbf16, #tpu.memory_space<vmem>>, %arg11: memref<2x1x128xf32, #tpu.memory_space<vmem>>, %arg12: memref<128x128xbf16, #tpu.memory_space<vmem>>, %arg13: memref<1x128xf32, #tpu.memory_space<vmem>>, %arg14: memref<16x128xf32, #tpu.memory_space<vmem>>, %arg15: memref<16x128xf32, #tpu.memory_space<vmem>>, %arg16: memref<128x128xf32, #tpu.memory_space<vmem>>) attributes {dimension_semantics = [], scalar_prefetch = 0 : i64, scratch_operands = 2 : i64, tpu.core_type = #tpu.core_type<tc>} {
    %c0 = arith.constant 0 : index
    %c0_0 = arith.constant 0 : index
    %0 = vector.load %arg0[%c0, %c0_0] : memref<16x128xf32, #tpu.memory_space<vmem>>, vector<16x128xf32>
    %c0_1 = arith.constant 0 : index
    %c0_2 = arith.constant 0 : index
    %1 = vector.load %arg4[%c0_1, %c0_2] : memref<128x128xbf16, #tpu.memory_space<vmem>>, vector<128x128xbf16>
    %2 = arith.truncf %0 : vector<16x128xf32> to vector<16x128xbf16>
    %cst = arith.constant dense<0.000000e+00> : vector<16x128xf32>
    %3 = tpu.matmul %2, %1, %cst {dimension_numbers = #tpu.dot_dimension_numbers<[1], [0], [0], [1], [0, 0, 1, 1], [], []>} : vector<16x128xbf16>, vector<128x128xbf16>, vector<16x128xf32> -> vector<16x128xf32>
    %c0_3 = arith.constant 0 : index
    %c0_4 = arith.constant 0 : index
    %4 = vector.load %arg5[%c0_3, %c0_4] : memref<1x128xf32, #tpu.memory_space<vmem>>, vector<1x128xf32>
    %5 = vector.broadcast %4 : vector<1x128xf32> to vector<16x128xf32>
    %6 = arith.addf %3, %5 : vector<16x128xf32>
    %cst_5 = arith.constant 0.000000e+00 : f32
    %7 = vector.broadcast %cst_5 : f32 to vector<16x128xf32>
    %8 = arith.cmpf oge, %6, %7 : vector<16x128xf32>
    %cst_6 = arith.constant 0.00999999977 : f32
    %9 = vector.broadcast %cst_6 : f32 to vector<16x128xf32>
    %10 = arith.mulf %9, %6 : vector<16x128xf32>
    %11 = arith.select %8, %6, %10 : vector<16x128xi1>, vector<16x128xf32>
    %c0_7 = arith.constant 0 : index
    %c0_8 = arith.constant 0 : index
    %12 = vector.load %arg15[%c0_7, %c0_8] : memref<16x128xf32, #tpu.memory_space<vmem>>, vector<16x128xf32>
    tpu.vector_store %arg15[%c0_7, %c0_8], %11 {strides = array<i32>} : memref<16x128xf32, #tpu.memory_space<vmem>>, vector<16x128xf32>,
    %13 = tpu.iota {dimensions = array<i32: 0>} : vector<16x128xi32>
    %c0_9 = arith.constant 0 : index
    %c0_10 = arith.constant 0 : index
    %14 = vector.load %arg3[%c0_9, %c0_10] : memref<1x128xi32, #tpu.memory_space<vmem>>, vector<1x128xi32>
    %15 = vector.broadcast %14 : vector<1x128xi32> to vector<16x128xi32>
    %16 = arith.cmpi eq, %13, %15 : vector<16x128xi32>
    %17 = arith.extui %16 : vector<16x128xi1> to vector<16x128xi32>
    %18 = arith.sitofp %17 : vector<16x128xi32> to vector<16x128xf32>
    %19 = arith.truncf %18 : vector<16x128xf32> to vector<16x128xbf16>
    %c0_11 = arith.constant 0 : index
    %c0_12 = arith.constant 0 : index
    %20 = vector.load %arg1[%c0_11, %c0_12] : memref<128x128xf32, #tpu.memory_space<vmem>>, vector<128x128xf32>
    %c0_13 = arith.constant 0 : index
    %c0_14 = arith.constant 0 : index
    %21 = vector.load %arg6[%c0_13, %c0_14] : memref<128x256xbf16, #tpu.memory_space<vmem>>, vector<128x256xbf16>
    %22 = arith.truncf %20 : vector<128x128xf32> to vector<128x128xbf16>
    %cst_15 = arith.constant dense<0.000000e+00> : vector<128x256xf32>
    %23 = tpu.matmul %22, %21, %cst_15 {dimension_numbers = #tpu.dot_dimension_numbers<[1], [0], [0], [1], [0, 0, 1, 1], [], []>} : vector<128x128xbf16>, vector<128x256xbf16>, vector<128x256xf32> -> vector<128x256xf32>
    %cst_16 = arith.constant 0.000000e+00 : f32
    %24 = vector.broadcast %cst_16 : f32 to vector<128x128xf32>
    %c0_17 = arith.constant 0 : index
    %c0_18 = arith.constant 0 : index
    %25 = vector.load %arg16[%c0_17, %c0_18] : memref<128x128xf32, #tpu.memory_space<vmem>>, vector<128x128xf32>
    tpu.vector_store %arg16[%c0_17, %c0_18], %24 {strides = array<i32>} : memref<128x128xf32, #tpu.memory_space<vmem>>, vector<128x128xf32>,
    %c0_i32 = arith.constant 0 : i32
    %c32_i32 = arith.constant 32 : i32
    %26 = arith.addi %c0_i32, %c32_i32 : i32
    %c1_i32 = arith.constant 1 : i32
    scf.for %arg17 = %c0_i32 to %26 step %c1_i32  : i32 {
      %109 = arith.index_cast %arg17 : i32 to index
      %110 = memref.load %arg2[%109] : memref<32xi32, #tpu.memory_space<smem>>
      %111 = arith.index_cast %110 : i32 to index
      %c0_86 = arith.constant 0 : index
      %112 = vector.load %arg15[%111, %c0_86] : memref<16x128xf32, #tpu.memory_space<vmem>>, vector<1x128xf32>
      %113 = arith.index_cast %arg17 : i32 to index
      %c0_87 = arith.constant 0 : index
      %114 = vector.load %arg16[%113, %c0_87] : memref<128x128xf32, #tpu.memory_space<vmem>>, vector<1x128xf32>
      tpu.vector_store %arg16[%113, %c0_87], %112 {strides = array<i32>} : memref<128x128xf32, #tpu.memory_space<vmem>>, vector<1x128xf32>,
    }
    %c32_i32_19 = arith.constant 32 : i32
    %27 = vector.extract_strided_slice %23 {offsets = [0, 0], sizes = [128, 128], strides = [1, 1]} : vector<128x256xf32> to vector<128x128xf32>
    %c0_20 = arith.constant 0 : index
    %c0_21 = arith.constant 0 : index
    %c0_22 = arith.constant 0 : index
    %28 = vector.load %arg7[%c0_20, %c0_21, %c0_22] : memref<2x1x128xf32, #tpu.memory_space<vmem>>, vector<1x1x128xf32>
    %29 = vector.shape_cast %28 : vector<1x1x128xf32> to vector<1x128xf32>
    %30 = vector.broadcast %29 : vector<1x128xf32> to vector<128x128xf32>
    %31 = arith.addf %27, %30 : vector<128x128xf32>
    %c0_23 = arith.constant 0 : index
    %c0_24 = arith.constant 0 : index
    %32 = vector.load %arg16[%c0_23, %c0_24] : memref<128x128xf32, #tpu.memory_space<vmem>>, vector<128x128xf32>
    %33 = arith.addf %32, %31 : vector<128x128xf32>
    %cst_25 = arith.constant 0.000000e+00 : f32
    %34 = vector.broadcast %cst_25 : f32 to vector<128x128xf32>
    %35 = arith.maximumf %33, %34 : vector<128x128xf32>
    %36 = arith.truncf %35 : vector<128x128xf32> to vector<128x128xbf16>
    %cst_26 = arith.constant dense<0.000000e+00> : vector<16x128xf32>
    %37 = tpu.matmul %19, %36, %cst_26 {dimension_numbers = #tpu.dot_dimension_numbers<[1], [0], [0], [1], [0, 0, 1, 1], [], []>} : vector<16x128xbf16>, vector<128x128xbf16>, vector<16x128xf32> -> vector<16x128xf32>
    %c0_27 = arith.constant 0 : index
    %c0_28 = arith.constant 0 : index
    %38 = vector.load %arg15[%c0_27, %c0_28] : memref<16x128xf32, #tpu.memory_space<vmem>>, vector<16x128xf32>
    %39 = arith.addf %38, %37 : vector<16x128xf32>
    %c0_29 = arith.constant 0 : index
    %c0_30 = arith.constant 0 : index
    %c0_31 = arith.constant 0 : index
    %40 = vector.load %arg8[%c0_29, %c0_30, %c0_31] : memref<2x128x128xbf16, #tpu.memory_space<vmem>>, vector<1x128x128xbf16>
    %41 = vector.shape_cast %40 : vector<1x128x128xbf16> to vector<128x128xbf16>
    %42 = arith.truncf %39 : vector<16x128xf32> to vector<16x128xbf16>
    %cst_32 = arith.constant dense<0.000000e+00> : vector<16x128xf32>
    %43 = tpu.matmul %42, %41, %cst_32 {dimension_numbers = #tpu.dot_dimension_numbers<[1], [0], [0], [1], [0, 0, 1, 1], [], []>} : vector<16x128xbf16>, vector<128x128xbf16>, vector<16x128xf32> -> vector<16x128xf32>
    %c0_33 = arith.constant 0 : index
    %c0_34 = arith.constant 0 : index
    %c0_35 = arith.constant 0 : index
    %44 = vector.load %arg9[%c0_33, %c0_34, %c0_35] : memref<2x1x128xf32, #tpu.memory_space<vmem>>, vector<1x1x128xf32>
    %45 = vector.shape_cast %44 : vector<1x1x128xf32> to vector<1x128xf32>
    %46 = vector.broadcast %45 : vector<1x128xf32> to vector<16x128xf32>
    %47 = arith.addf %43, %46 : vector<16x128xf32>
    %cst_36 = arith.constant 0.000000e+00 : f32
    %48 = vector.broadcast %cst_36 : f32 to vector<16x128xf32>
    %49 = arith.cmpf oge, %47, %48 : vector<16x128xf32>
    %cst_37 = arith.constant 0.00999999977 : f32
    %50 = vector.broadcast %cst_37 : f32 to vector<16x128xf32>
    %51 = arith.mulf %50, %47 : vector<16x128xf32>
    %52 = arith.select %49, %47, %51 : vector<16x128xi1>, vector<16x128xf32>
    %c0_38 = arith.constant 0 : index
    %c0_39 = arith.constant 0 : index
    %c0_40 = arith.constant 0 : index
    %53 = vector.load %arg10[%c0_38, %c0_39, %c0_40] : memref<2x128x128xbf16, #tpu.memory_space<vmem>>, vector<1x128x128xbf16>
    %54 = vector.shape_cast %53 : vector<1x128x128xbf16> to vector<128x128xbf16>
    %55 = arith.truncf %52 : vector<16x128xf32> to vector<16x128xbf16>
    %cst_41 = arith.constant dense<0.000000e+00> : vector<16x128xf32>
    %56 = tpu.matmul %55, %54, %cst_41 {dimension_numbers = #tpu.dot_dimension_numbers<[1], [0], [0], [1], [0, 0, 1, 1], [], []>} : vector<16x128xbf16>, vector<128x128xbf16>, vector<16x128xf32> -> vector<16x128xf32>
    %c0_42 = arith.constant 0 : index
    %c0_43 = arith.constant 0 : index
    %c0_44 = arith.constant 0 : index
    %57 = vector.load %arg11[%c0_42, %c0_43, %c0_44] : memref<2x1x128xf32, #tpu.memory_space<vmem>>, vector<1x1x128xf32>
    %58 = vector.shape_cast %57 : vector<1x1x128xf32> to vector<1x128xf32>
    %59 = vector.broadcast %58 : vector<1x128xf32> to vector<16x128xf32>
    %60 = arith.addf %56, %59 : vector<16x128xf32>
    %61 = math.tanh %60 : vector<16x128xf32>
    %c0_45 = arith.constant 0 : index
    %c0_46 = arith.constant 0 : index
    %62 = vector.load %arg15[%c0_45, %c0_46] : memref<16x128xf32, #tpu.memory_space<vmem>>, vector<16x128xf32>
    tpu.vector_store %arg15[%c0_45, %c0_46], %61 {strides = array<i32>} : memref<16x128xf32, #tpu.memory_space<vmem>>, vector<16x128xf32>,
    %c0_i32_47 = arith.constant 0 : i32
    %c32_i32_48 = arith.constant 32 : i32
    %63 = arith.addi %c0_i32_47, %c32_i32_48 : i32
    %c1_i32_49 = arith.constant 1 : i32
    scf.for %arg17 = %c0_i32_47 to %63 step %c1_i32_49  : i32 {
      %109 = arith.index_cast %arg17 : i32 to index
      %110 = memref.load %arg2[%109] : memref<32xi32, #tpu.memory_space<smem>>
      %111 = arith.index_cast %110 : i32 to index
      %c0_86 = arith.constant 0 : index
      %112 = vector.load %arg15[%111, %c0_86] : memref<16x128xf32, #tpu.memory_space<vmem>>, vector<1x128xf32>
      %113 = arith.index_cast %arg17 : i32 to index
      %c0_87 = arith.constant 0 : index
      %114 = vector.load %arg16[%113, %c0_87] : memref<128x128xf32, #tpu.memory_space<vmem>>, vector<1x128xf32>
      tpu.vector_store %arg16[%113, %c0_87], %112 {strides = array<i32>} : memref<128x128xf32, #tpu.memory_space<vmem>>, vector<1x128xf32>,
    }
    %c32_i32_50 = arith.constant 32 : i32
    %64 = vector.extract_strided_slice %23 {offsets = [0, 128], sizes = [128, 128], strides = [1, 1]} : vector<128x256xf32> to vector<128x128xf32>
    %c1 = arith.constant 1 : index
    %c0_51 = arith.constant 0 : index
    %c0_52 = arith.constant 0 : index
    %65 = vector.load %arg7[%c1, %c0_51, %c0_52] : memref<2x1x128xf32, #tpu.memory_space<vmem>>, vector<1x1x128xf32>
    %66 = vector.shape_cast %65 : vector<1x1x128xf32> to vector<1x128xf32>
    %67 = vector.broadcast %66 : vector<1x128xf32> to vector<128x128xf32>
    %68 = arith.addf %64, %67 : vector<128x128xf32>
    %c0_53 = arith.constant 0 : index
    %c0_54 = arith.constant 0 : index
    %69 = vector.load %arg16[%c0_53, %c0_54] : memref<128x128xf32, #tpu.memory_space<vmem>>, vector<128x128xf32>
    %70 = arith.addf %69, %68 : vector<128x128xf32>
    %cst_55 = arith.constant 0.000000e+00 : f32
    %71 = vector.broadcast %cst_55 : f32 to vector<128x128xf32>
    %72 = arith.maximumf %70, %71 : vector<128x128xf32>
    %73 = arith.truncf %72 : vector<128x128xf32> to vector<128x128xbf16>
    %cst_56 = arith.constant dense<0.000000e+00> : vector<16x128xf32>
    %74 = tpu.matmul %19, %73, %cst_56 {dimension_numbers = #tpu.dot_dimension_numbers<[1], [0], [0], [1], [0, 0, 1, 1], [], []>} : vector<16x128xbf16>, vector<128x128xbf16>, vector<16x128xf32> -> vector<16x128xf32>
    %c0_57 = arith.constant 0 : index
    %c0_58 = arith.constant 0 : index
    %75 = vector.load %arg15[%c0_57, %c0_58] : memref<16x128xf32, #tpu.memory_space<vmem>>, vector<16x128xf32>
    %76 = arith.addf %75, %74 : vector<16x128xf32>
    %c1_59 = arith.constant 1 : index
    %c0_60 = arith.constant 0 : index
    %c0_61 = arith.constant 0 : index
    %77 = vector.load %arg8[%c1_59, %c0_60, %c0_61] : memref<2x128x128xbf16, #tpu.memory_space<vmem>>, vector<1x128x128xbf16>
    %78 = vector.shape_cast %77 : vector<1x128x128xbf16> to vector<128x128xbf16>
    %79 = arith.truncf %76 : vector<16x128xf32> to vector<16x128xbf16>
    %cst_62 = arith.constant dense<0.000000e+00> : vector<16x128xf32>
    %80 = tpu.matmul %79, %78, %cst_62 {dimension_numbers = #tpu.dot_dimension_numbers<[1], [0], [0], [1], [0, 0, 1, 1], [], []>} : vector<16x128xbf16>, vector<128x128xbf16>, vector<16x128xf32> -> vector<16x128xf32>
    %c1_63 = arith.constant 1 : index
    %c0_64 = arith.constant 0 : index
    %c0_65 = arith.constant 0 : index
    %81 = vector.load %arg9[%c1_63, %c0_64, %c0_65] : memref<2x1x128xf32, #tpu.memory_space<vmem>>, vector<1x1x128xf32>
    %82 = vector.shape_cast %81 : vector<1x1x128xf32> to vector<1x128xf32>
    %83 = vector.broadcast %82 : vector<1x128xf32> to vector<16x128xf32>
    %84 = arith.addf %80, %83 : vector<16x128xf32>
    %cst_66 = arith.constant 0.000000e+00 : f32
    %85 = vector.broadcast %cst_66 : f32 to vector<16x128xf32>
    %86 = arith.cmpf oge, %84, %85 : vector<16x128xf32>
    %cst_67 = arith.constant 0.00999999977 : f32
    %87 = vector.broadcast %cst_67 : f32 to vector<16x128xf32>
    %88 = arith.mulf %87, %84 : vector<16x128xf32>
    %89 = arith.select %86, %84, %88 : vector<16x128xi1>, vector<16x128xf32>
    %c1_68 = arith.constant 1 : index
    %c0_69 = arith.constant 0 : index
    %c0_70 = arith.constant 0 : index
    %90 = vector.load %arg10[%c1_68, %c0_69, %c0_70] : memref<2x128x128xbf16, #tpu.memory_space<vmem>>, vector<1x128x128xbf16>
    %91 = vector.shape_cast %90 : vector<1x128x128xbf16> to vector<128x128xbf16>
    %92 = arith.truncf %89 : vector<16x128xf32> to vector<16x128xbf16>
    %cst_71 = arith.constant dense<0.000000e+00> : vector<16x128xf32>
    %93 = tpu.matmul %92, %91, %cst_71 {dimension_numbers = #tpu.dot_dimension_numbers<[1], [0], [0], [1], [0, 0, 1, 1], [], []>} : vector<16x128xbf16>, vector<128x128xbf16>, vector<16x128xf32> -> vector<16x128xf32>
    %c1_72 = arith.constant 1 : index
    %c0_73 = arith.constant 0 : index
    %c0_74 = arith.constant 0 : index
    %94 = vector.load %arg11[%c1_72, %c0_73, %c0_74] : memref<2x1x128xf32, #tpu.memory_space<vmem>>, vector<1x1x128xf32>
    %95 = vector.shape_cast %94 : vector<1x1x128xf32> to vector<1x128xf32>
    %96 = vector.broadcast %95 : vector<1x128xf32> to vector<16x128xf32>
    %97 = arith.addf %93, %96 : vector<16x128xf32>
    %98 = math.tanh %97 : vector<16x128xf32>
    %c0_75 = arith.constant 0 : index
    %c0_76 = arith.constant 0 : index
    %99 = vector.load %arg15[%c0_75, %c0_76] : memref<16x128xf32, #tpu.memory_space<vmem>>, vector<16x128xf32>
    tpu.vector_store %arg15[%c0_75, %c0_76], %98 {strides = array<i32>} : memref<16x128xf32, #tpu.memory_space<vmem>>, vector<16x128xf32>,
    %c0_77 = arith.constant 0 : index
    %c0_78 = arith.constant 0 : index
    %100 = vector.load %arg15[%c0_77, %c0_78] : memref<16x128xf32, #tpu.memory_space<vmem>>, vector<16x128xf32>
    %c0_79 = arith.constant 0 : index
    %c0_80 = arith.constant 0 : index
    %101 = vector.load %arg12[%c0_79, %c0_80] : memref<128x128xbf16, #tpu.memory_space<vmem>>, vector<128x128xbf16>
    %102 = arith.truncf %100 : vector<16x128xf32> to vector<16x128xbf16>
    %cst_81 = arith.constant dense<0.000000e+00> : vector<16x128xf32>
    %103 = tpu.matmul %102, %101, %cst_81 {dimension_numbers = #tpu.dot_dimension_numbers<[1], [0], [0], [1], [0, 0, 1, 1], [], []>} : vector<16x128xbf16>, vector<128x128xbf16>, vector<16x128xf32> -> vector<16x128xf32>
    %c0_82 = arith.constant 0 : index
    %c0_83 = arith.constant 0 : index
    %104 = vector.load %arg13[%c0_82, %c0_83] : memref<1x128xf32, #tpu.memory_space<vmem>>, vector<1x128xf32>
    %105 = vector.broadcast %104 : vector<1x128xf32> to vector<16x128xf32>
    %106 = arith.addf %103, %105 : vector<16x128xf32>
    %107 = math.tanh %106 : vector<16x128xf32>
    %c0_84 = arith.constant 0 : index
    %c0_85 = arith.constant 0 : index
    %108 = vector.load %arg14[%c0_84, %c0_85] : memref<16x128xf32, #tpu.memory_space<vmem>>, vector<16x128xf32>
    tpu.vector_store %arg14[%c0_84, %c0_85], %107 {strides = array<i32>} : memref<16x128xf32, #tpu.memory_space<vmem>>, vector<16x128xf32>,
    return
  }
}

</mosaic_0001>

<llo_original>
// kernel: tpu_custom_call.1
$region0: #{tpu_custom_call.1}
  #allocation0 [shape = 'u32[]', space=smem, size = 0x4, offset = 0x4, fixed_abs, tag = 'smem constant byte address 0x4 - core index']
  #allocation1 [shape = 'u32[144,128]{1,0:T(1,128)}', space=vmem, size = 0x12000, scoped, tag = 'internal scratch']
  #allocation2 [shape = 'f32[16,128]{1,0:T(8,128)}', space=vmem, size = 0x2000, scoped, tag = 'scratch operand']
  #allocation3 [shape = 'f32[128,128]{1,0:T(8,128)}', space=vmem, size = 0x10000, scoped, tag = 'scratch operand']
  %s0 = inlined_call_operand.hbm [shape: f32[16,128], index: 0, kind: input, shape index: {}]
  %s1 = inlined_call_operand.hbm [shape: f32[128,128], index: 1, kind: input, shape index: {}]
  %s2 = inlined_call_operand.vmem [shape: s32[32], index: 2, kind: input, shape index: {}]
  %s3 = inlined_call_operand.vmem [shape: s32[1,128], index: 3, kind: input, shape index: {}]
  %s4 = inlined_call_operand.hbm [shape: bf16[128,128], index: 4, kind: input, shape index: {}]
  %s5 = inlined_call_operand.vmem [shape: f32[1,128], index: 5, kind: input, shape index: {}]
  %s6 = inlined_call_operand.hbm [shape: bf16[128,256], index: 6, kind: input, shape index: {}]
  %s7 = inlined_call_operand.vmem [shape: f32[2,1,128], index: 7, kind: input, shape index: {}]
  %s8 = inlined_call_operand.hbm [shape: bf16[2,128,128], index: 8, kind: input, shape index: {}]
  %s9 = inlined_call_operand.vmem [shape: f32[2,1,128], index: 9, kind: input, shape index: {}]
  %s10 = inlined_call_operand.hbm [shape: bf16[2,128,128], index: 10, kind: input, shape index: {}]
  %s11 = inlined_call_operand.vmem [shape: f32[2,1,128], index: 11, kind: input, shape index: {}]
  %s12 = inlined_call_operand.hbm [shape: bf16[128,128], index: 12, kind: input, shape index: {}]
  %s13 = inlined_call_operand.vmem [shape: f32[1,128], index: 13, kind: input, shape index: {}]
  %s14 = inlined_call_operand.hbm [shape: f32[16,128], index: 14, kind: output, shape index: {}]
  %s15 = sld [smem:[#allocation0]]
  $region112: #{tpu_custom_call.1} parent=0
    _
  %s17 = ssub.s32 1, %s15
  %s18 = scalar_select 0, %s17, %s15
  $region1: #{tpu_custom_call.1} parent=0
    #allocation4 [shape = 'u8[8192]{0}', space=vmem, size = 0x2000, scoped, tag = 'input window, operand 0, single buffered']
    #allocation5 [shape = 's32[1]{0}', space=sflag, size = 0x4, scoped, tag = 'scoped memory for tpu_custom_call.1']
    #allocation6 [shape = 's32[1]{0}', space=sflag, size = 0x4, scoped, tag = 'scoped memory for tpu_custom_call.1']
    #allocation7 [shape = 's32[1]{0}', space=sflag, size = 0x4, scoped, tag = 'scoped memory for tpu_custom_call.1']
    #allocation8 [shape = 'u8[65536]{0}', space=vmem, size = 0x10000, scoped, tag = 'input window, operand 1, single buffered']
    #allocation9 [shape = 's32[1]{0}', space=sflag, size = 0x4, scoped, tag = 'scoped memory for tpu_custom_call.1']
    #allocation10 [shape = 'u8[512]{0}', space=smem, size = 0x200, scoped, tag = 'input window, operand 2, single buffered']
    #allocation11 [shape = 'u8[32768]{0}', space=vmem, size = 0x8000, scoped, tag = 'input window, operand 4, single buffered']
    #allocation12 [shape = 'u8[65536]{0}', space=vmem, size = 0x10000, scoped, tag = 'input window, operand 6, single buffered']
    #allocation13 [shape = 's32[1]{0}', space=sflag, size = 0x4, scoped, tag = 'scoped memory for tpu_custom_call.1']
    #allocation14 [shape = 'u8[65536]{0}', space=vmem, size = 0x10000, scoped, tag = 'input window, operand 8, single buffered']
    #allocation15 [shape = 'u8[65536]{0}', space=vmem, size = 0x10000, scoped, tag = 'input window, operand 10, single buffered']
    #allocation16 [shape = 's32[1]{0}', space=sflag, size = 0x4, scoped, tag = 'scoped memory for tpu_custom_call.1']
    #allocation17 [shape = 'u8[32768]{0}', space=vmem, size = 0x8000, scoped, tag = 'input window, operand 12, single buffered']
    #allocation18 [shape = 'u8[8192]{0}', space=vmem, size = 0x2000, scoped, tag = 'output window, operand 0, single buffered']
    %19 = vsyncpa [#allocation5], 0
    %20 = vsyncpa [#allocation9], 0
    %21 = vsyncpa [#allocation7], 0
    %22 = vsyncpa [#allocation13], 0
    %23 = vsyncpa [#allocation16], 0
    %24 = vsyncpa [#allocation6], 0
    // Predicated region
    $region2: #{tpu_custom_call.1} parent=1 // pred_check
      _
    $region3: #{tpu_custom_call.1} parent=1 // pred_check_branch
      %26 = sbr.rel (0) target = $region5
    $region4: #{tpu_custom_call.1} parent=1 // pred_region
      %s28 = ssub.s32 256, 256
      %29 = vsyncadd [#allocation5], %s28
      %s30 = sshll.u32 [#allocation4], 4
      %s31 = int_to_ptr.vmem [resolvable:$true] %s30
      %36 = dma.hbm_to_vmem [thread:$0]  %s0, 256, %s31, [#allocation5], 128, 128, 8
    $region5: #{tpu_custom_call.1} parent=1 // pred_fallthru
      _
    // Predicated region
    $region6: #{tpu_custom_call.1} parent=1 // pred_check
      _
    $region7: #{tpu_custom_call.1} parent=1 // pred_check_branch
      %38 = sbr.rel (0) target = $region9
    $region8: #{tpu_custom_call.1} parent=1 // pred_region
      %s40 = ssub.s32 2048, 2048
      %41 = vsyncadd [#allocation9], %s40
      %s42 = sshll.u32 [#allocation8], 4
      %s43 = int_to_ptr.vmem [resolvable:$true] %s42
      %48 = dma.hbm_to_vmem [thread:$0]  %s1, 2048, %s43, [#allocation9], 128, 128, 8
    $region9: #{tpu_custom_call.1} parent=1 // pred_fallthru
      _
    // Predicated region
    $region10: #{tpu_custom_call.1} parent=1 // pred_check
      _
    $region11: #{tpu_custom_call.1} parent=1 // pred_check_branch
      %50 = sbr.rel (0) target = $region13
    $region12: #{tpu_custom_call.1} parent=1 // pred_region
      %s52 = ssub.s32 16, 16
      %53 = vsyncadd [#allocation7], %s52
      %s55 = sshll.u32 %s2, 4
      %s56 = int_to_ptr.vmem [resolvable:$true] %s55
      %58 = dma.vmem_to_smem %s56, 16, [#allocation10], [#allocation7]
    $region13: #{tpu_custom_call.1} parent=1 // pred_fallthru
      _
    // Predicated region
    $region14: #{tpu_custom_call.1} parent=1 // pred_check
      _
    $region15: #{tpu_custom_call.1} parent=1 // pred_check_branch
      %60 = sbr.rel (0) target = $region17
    $region16: #{tpu_custom_call.1} parent=1 // pred_region
      _
    $region17: #{tpu_custom_call.1} parent=1 // pred_fallthru
      _
    // Predicated region
    $region18: #{tpu_custom_call.1} parent=1 // pred_check
      _
    $region19: #{tpu_custom_call.1} parent=1 // pred_check_branch
      %62 = sbr.rel (0) target = $region21
    $region20: #{tpu_custom_call.1} parent=1 // pred_region
      %s64 = ssub.s32 1024, 1024
      %65 = vsyncadd [#allocation9], %s64
      %s66 = sshll.u32 [#allocation11], 4
      %s67 = int_to_ptr.vmem [resolvable:$true] %s66
      %72 = dma.hbm_to_vmem [thread:$0]  %s4, 1024, %s67, [#allocation9], 64, 64, 4
    $region21: #{tpu_custom_call.1} parent=1 // pred_fallthru
      _
    // Predicated region
    $region22: #{tpu_custom_call.1} parent=1 // pred_check
      _
    $region23: #{tpu_custom_call.1} parent=1 // pred_check_branch
      %74 = sbr.rel (0) target = $region25
    $region24: #{tpu_custom_call.1} parent=1 // pred_region
      _
    $region25: #{tpu_custom_call.1} parent=1 // pred_fallthru
      _
    // Predicated region
    $region26: #{tpu_custom_call.1} parent=1 // pred_check
      _
    $region27: #{tpu_custom_call.1} parent=1 // pred_check_branch
      %76 = sbr.rel (0) target = $region29
    $region28: #{tpu_custom_call.1} parent=1 // pred_region
      %s78 = ssub.s32 2048, 2048
      %79 = vsyncadd [#allocation13], %s78
      %s80 = sshll.u32 [#allocation12], 4
      %s81 = int_to_ptr.vmem [resolvable:$true] %s80
      %86 = dma.hbm_to_vmem [thread:$0]  %s6, 2048, %s81, [#allocation13], 128, 128, 8
    $region29: #{tpu_custom_call.1} parent=1 // pred_fallthru
      _
    // Predicated region
    $region30: #{tpu_custom_call.1} parent=1 // pred_check
      _
    $region31: #{tpu_custom_call.1} parent=1 // pred_check_branch
      %88 = sbr.rel (0) target = $region33
    $region32: #{tpu_custom_call.1} parent=1 // pred_region
      _
    $region33: #{tpu_custom_call.1} parent=1 // pred_fallthru
      _
    // Predicated region
    $region34: #{tpu_custom_call.1} parent=1 // pred_check
      _
    $region35: #{tpu_custom_call.1} parent=1 // pred_check_branch
      %90 = sbr.rel (0) target = $region37
    $region36: #{tpu_custom_call.1} parent=1 // pred_region
      %s92 = ssub.s32 2048, 2048
      %93 = vsyncadd [#allocation13], %s92
      %s94 = sshll.u32 [#allocation14], 4
      %s95 = int_to_ptr.vmem [resolvable:$true] %s94
      %100 = dma.hbm_to_vmem [thread:$0]  %s8, 2048, %s95, [#allocation13], 64, 64, 4
    $region37: #{tpu_custom_call.1} parent=1 // pred_fallthru
      _
    // Predicated region
    $region38: #{tpu_custom_call.1} parent=1 // pred_check
      _
    $region39: #{tpu_custom_call.1} parent=1 // pred_check_branch
      %102 = sbr.rel (0) target = $region41
    $region40: #{tpu_custom_call.1} parent=1 // pred_region
      _
    $region41: #{tpu_custom_call.1} parent=1 // pred_fallthru
      _
    // Predicated region
    $region42: #{tpu_custom_call.1} parent=1 // pred_check
      _
    $region43: #{tpu_custom_call.1} parent=1 // pred_check_branch
      %104 = sbr.rel (0) target = $region45
    $region44: #{tpu_custom_call.1} parent=1 // pred_region
      %s106 = ssub.s32 2048, 2048
      %107 = vsyncadd [#allocation16], %s106
      %s108 = sshll.u32 [#allocation15], 4
      %s109 = int_to_ptr.vmem [resolvable:$true] %s108
      %114 = dma.hbm_to_vmem [thread:$0]  %s10, 2048, %s109, [#allocation16], 64, 64, 4
    $region45: #{tpu_custom_call.1} parent=1 // pred_fallthru
      _
    // Predicated region
    $region46: #{tpu_custom_call.1} parent=1 // pred_check
      _
    $region47: #{tpu_custom_call.1} parent=1 // pred_check_branch
      %116 = sbr.rel (0) target = $region49
    $region48: #{tpu_custom_call.1} parent=1 // pred_region
      _
    $region49: #{tpu_custom_call.1} parent=1 // pred_fallthru
      _
    // Predicated region
    $region50: #{tpu_custom_call.1} parent=1 // pred_check
      _
    $region51: #{tpu_custom_call.1} parent=1 // pred_check_branch
      %118 = sbr.rel (0) target = $region53
    $region52: #{tpu_custom_call.1} parent=1 // pred_region
      %s120 = ssub.s32 1024, 1024
      %121 = vsyncadd [#allocation16], %s120
      %s122 = sshll.u32 [#allocation17], 4
      %s123 = int_to_ptr.vmem [resolvable:$true] %s122
      %128 = dma.hbm_to_vmem [thread:$0]  %s12, 1024, %s123, [#allocation16], 64, 64, 4
    $region53: #{tpu_custom_call.1} parent=1 // pred_fallthru
      _
    // Predicated region
    $region54: #{tpu_custom_call.1} parent=1 // pred_check
      _
    $region55: #{tpu_custom_call.1} parent=1 // pred_check_branch
      %130 = sbr.rel (0) target = $region57
    $region56: #{tpu_custom_call.1} parent=1 // pred_region
      _
    $region57: #{tpu_custom_call.1} parent=1 // pred_fallthru
      _
    // Predicated region
    $region58: #{tpu_custom_call.1} parent=1 // pred_check
      _
    $region59: #{tpu_custom_call.1} parent=1 // pred_check_branch
      %132 = sbr.rel (0) target = $region61
    $region60: #{tpu_custom_call.1} parent=1 // pred_region
      %133 = dma.done [#allocation5], 256
    $region61: #{tpu_custom_call.1} parent=1 // pred_fallthru
      _
    // Predicated region
    $region62: #{tpu_custom_call.1} parent=1 // pred_check
      _
    $region63: #{tpu_custom_call.1} parent=1 // pred_check_branch
      %135 = sbr.rel (0) target = $region65
    $region64: #{tpu_custom_call.1} parent=1 // pred_region
      %136 = dma.done [#allocation9], 2048
    $region65: #{tpu_custom_call.1} parent=1 // pred_fallthru
      _
    // Predicated region
    $region66: #{tpu_custom_call.1} parent=1 // pred_check
      _
    $region67: #{tpu_custom_call.1} parent=1 // pred_check_branch
      %138 = sbr.rel (0) target = $region69
    $region68: #{tpu_custom_call.1} parent=1 // pred_region
      %139 = dma.done [#allocation7], 16
    $region69: #{tpu_custom_call.1} parent=1 // pred_fallthru
      _
    // Predicated region
    $region70: #{tpu_custom_call.1} parent=1 // pred_check
      _
    $region71: #{tpu_custom_call.1} parent=1 // pred_check_branch
      %141 = sbr.rel (0) target = $region73
    $region72: #{tpu_custom_call.1} parent=1 // pred_region
      %142 = dma.done [#allocation9], 1024
    $region73: #{tpu_custom_call.1} parent=1 // pred_fallthru
      _
    // Predicated region
    $region74: #{tpu_custom_call.1} parent=1 // pred_check
      _
    $region75: #{tpu_custom_call.1} parent=1 // pred_check_branch
      %144 = sbr.rel (0) target = $region77
    $region76: #{tpu_custom_call.1} parent=1 // pred_region
      %145 = dma.done [#allocation13], 2048
    $region77: #{tpu_custom_call.1} parent=1 // pred_fallthru
      _
    // Predicated region
    $region78: #{tpu_custom_call.1} parent=1 // pred_check
      _
    $region79: #{tpu_custom_call.1} parent=1 // pred_check_branch
      %147 = sbr.rel (0) target = $region81
    $region80: #{tpu_custom_call.1} parent=1 // pred_region
      %148 = dma.done [#allocation13], 2048
    $region81: #{tpu_custom_call.1} parent=1 // pred_fallthru
      _
    // Predicated region
    $region82: #{tpu_custom_call.1} parent=1 // pred_check
      _
    $region83: #{tpu_custom_call.1} parent=1 // pred_check_branch
      %150 = sbr.rel (0) target = $region85
    $region84: #{tpu_custom_call.1} parent=1 // pred_region
      %151 = dma.done [#allocation16], 2048
    $region85: #{tpu_custom_call.1} parent=1 // pred_fallthru
      _
    // Predicated region
    $region86: #{tpu_custom_call.1} parent=1 // pred_check
      _
    $region87: #{tpu_custom_call.1} parent=1 // pred_check_branch
      %153 = sbr.rel (0) target = $region89
    $region88: #{tpu_custom_call.1} parent=1 // pred_region
      %154 = dma.done [#allocation16], 1024
    $region89: #{tpu_custom_call.1} parent=1 // pred_fallthru
      _
    %155 = sfence
    %v157 = vld [vmem:[#allocation4] sm:$0xff]
    %v158 = vld [vmem:[#allocation4 + $0x8] sm:$0xff]
    %v159 = vld [vmem:[#allocation11] sm:$0xf]
    %v160 = vld [vmem:[#allocation11 + $0x4] sm:$0xf]
    %v161 = vld [vmem:[#allocation11 + $0x8] sm:$0xf]
    %v162 = vld [vmem:[#allocation11 + $0xc] sm:$0xf]
    %v163 = vld [vmem:[#allocation11 + $0x10] sm:$0xf]
    %v164 = vld [vmem:[#allocation11 + $0x14] sm:$0xf]
    %v165 = vld [vmem:[#allocation11 + $0x18] sm:$0xf]
    %v166 = vld [vmem:[#allocation11 + $0x1c] sm:$0xf]
    %v167 = vld [vmem:[#allocation11 + $0x20] sm:$0xf]
    %v168 = vld [vmem:[#allocation11 + $0x24] sm:$0xf]
    %v169 = vld [vmem:[#allocation11 + $0x28] sm:$0xf]
    %v170 = vld [vmem:[#allocation11 + $0x2c] sm:$0xf]
    %v171 = vld [vmem:[#allocation11 + $0x30] sm:$0xf]
    %v172 = vld [vmem:[#allocation11 + $0x34] sm:$0xf]
    %v173 = vld [vmem:[#allocation11 + $0x38] sm:$0xf]
    %v174 = vld [vmem:[#allocation11 + $0x3c] sm:$0xf]
    %v175 = vpack.c.bf16 %v158, %v157
    %v176 = vld [vmem:[%s5] sm:$0x1]
    %v178 = vlaneseq
    %v179 = vshrl.u32 %v178, 7
    %v180 = vsub.s32 0, %v179
    %v181 = vrot.slane %v176, %v180
    %v199 = vunpack.c.l.b16 %v159
    %v200 = vunpack.c.l.b16 %v160
    %v201 = vunpack.c.l.b16 %v161
    %v202 = vunpack.c.l.b16 %v162
    %v203 = vunpack.c.l.b16 %v163
    %v204 = vunpack.c.l.b16 %v164
    %v205 = vunpack.c.l.b16 %v165
    %v206 = vunpack.c.l.b16 %v166
    %v207 = vunpack.c.l.b16 %v167
    %v208 = vunpack.c.l.b16 %v168
    %v209 = vunpack.c.l.b16 %v169
    %v210 = vunpack.c.l.b16 %v170
    %v211 = vunpack.c.l.b16 %v171
    %v212 = vunpack.c.l.b16 %v172
    %v213 = vunpack.c.l.b16 %v173
    %v214 = vunpack.c.l.b16 %v174
    %v215 = vpack.c.b16 %v200, %v199
    %v216 = vpack.c.b16 %v202, %v201
    %v217 = vpack.c.b16 %v204, %v203
    %v218 = vpack.c.b16 %v206, %v205
    %v219 = vpack.c.b16 %v208, %v207
    %v220 = vpack.c.b16 %v210, %v209
    %v221 = vpack.c.b16 %v212, %v211
    %v222 = vpack.c.b16 %v214, %v213
    %231 = vmatprep.subr.bf16.mxu0 0
    %232 = vmatpush1.bf16.msra.mxu0 %v215
    %233 = vmatprep.subr.bf16.mxu0 0
    %234 = vmatpush1.bf16.msra.mxu0 %v216
    %235 = vmatprep.subr.bf16.mxu0 0
    %236 = vmatpush1.bf16.msra.mxu0 %v217
    %237 = vmatprep.subr.bf16.mxu0 0
    %238 = vmatpush1.bf16.msra.mxu0 %v218
    %239 = vmatprep.subr.bf16.mxu0 0
    %240 = vmatpush1.bf16.msra.mxu0 %v219
    %241 = vmatprep.subr.bf16.mxu0 0
    %242 = vmatpush1.bf16.msra.mxu0 %v220
    %243 = vmatprep.subr.bf16.mxu0 0
    %244 = vmatpush1.bf16.msra.mxu0 %v221
    %245 = vmatprep.subr.bf16.mxu0 0
    %246 = vmatpush1.bf16.msra.mxu0 %v222
    %247 = vmatprep.subr.bf16.mxu0 0
    %248 = vmatpush1.bf16.msra.mxu0 0
    %249 = vmatprep.subr.bf16.mxu0 0
    %250 = vmatpush1.bf16.msra.mxu0 0
    %251 = vmatprep.subr.bf16.mxu0 0
    %252 = vmatpush1.bf16.msra.mxu0 0
    %253 = vmatprep.subr.bf16.mxu0 0
    %254 = vmatpush1.bf16.msra.mxu0 0
    %255 = vmatprep.subr.bf16.mxu0 0
    %256 = vmatpush1.bf16.msra.mxu0 0
    %257 = vmatprep.subr.bf16.mxu0 0
    %258 = vmatpush1.bf16.msra.mxu0 0
    %259 = vmatprep.subr.bf16.mxu0 0
    %260 = vmatpush1.bf16.msra.mxu0 0
    %261 = vmatprep.subr.bf16.mxu0 0
    %262 = vmatpush1.bf16.msra.mxu0 0
    %263 = vmatprep.mubr.bf16.mxu0 0
    %264 = vmatmul.mubr.bf16.gmra.mrb[0].mxu0 %v175
    %v265 = vpop.f32.mrb[0].mxu0
    %v266 = vadd.f32 %v181, %v265
    %v267 = vpop.f32.mrb[0].mxu0
    %v268 = vpop.f32.mrb[0].mxu0
    %v269 = vadd.f32 %v181, %v268
    %v270 = vpop.f32.mrb[0].mxu0
    %271 = vdwg.mxu0
    %vm272 = vcmp.ge.f32.partialorder %v266, 0.0
    %vm273 = vcmp.ge.f32.partialorder %v269, 0.0
    %v274 = vmul.f32 %v266, 0.01
    %v275 = vmul.f32 %v269, 0.01
    %v276 = vsel %vm272, %v266, %v274
    %v277 = vsel %vm273, %v269, %v275
    %278 = vst [vmem:[#allocation2] sm:$0xff] %v276
    %279 = vst [vmem:[#allocation2 + $0x8] sm:$0xff] %v277
    %v280 = vlaneseq
    %v281 = vshrl.u32 %v280, 7
    %v282 = vadd.s32 %v281, 8
    %v283 = vld [vmem:[%s3] sm:$0x1]
    %v284 = vlaneseq
    %v285 = vshrl.u32 %v284, 7
    %v286 = vsub.s32 0, %v285
    %v287 = vrot.slane %v283, %v286
    %vm288 = vcmp.eq.s32.totalorder %v281, %v287
    %vm289 = vcmp.eq.s32.totalorder %v282, %v287
    %v290 = vsel %vm288, 1, 0
    %v291 = vsel %vm289, 1, 0
    %v292 = vcvt.s32.f32 %v290
    %v293 = vcvt.s32.f32 %v291
    %v294 = vpack.c.bf16 %v293, %v292
    %v295 = vld [vmem:[#allocation8] sm:$0xff]
    %v296 = vld [vmem:[#allocation8 + $0x8] sm:$0xff]
    %v297 = vld [vmem:[#allocation8 + $0x10] sm:$0xff]
    %v298 = vld [vmem:[#allocation8 + $0x18] sm:$0xff]
    %v299 = vld [vmem:[#allocation8 + $0x20] sm:$0xff]
    %v300 = vld [vmem:[#allocation8 + $0x28] sm:$0xff]
    %v301 = vld [vmem:[#allocation8 + $0x30] sm:$0xff]
    %v302 = vld [vmem:[#allocation8 + $0x38] sm:$0xff]
    %v303 = vld [vmem:[#allocation8 + $0x40] sm:$0xff]
    %v304 = vld [vmem:[#allocation8 + $0x48] sm:$0xff]
    %v305 = vld [vmem:[#allocation8 + $0x50] sm:$0xff]
    %v306 = vld [vmem:[#allocation8 + $0x58] sm:$0xff]
    %v307 = vld [vmem:[#allocation8 + $0x60] sm:$0xff]
    %v308 = vld [vmem:[#allocation8 + $0x68] sm:$0xff]
    %v309 = vld [vmem:[#allocation8 + $0x70] sm:$0xff]
    %v310 = vld [vmem:[#allocation8 + $0x78] sm:$0xff]
    %v311 = vld [vmem:[#allocation12] sm:$0xff]
    %v312 = vld [vmem:[#allocation12 + $0x8] sm:$0xff]
    %v313 = vld [vmem:[#allocation12 + $0x10] sm:$0xff]
    %v314 = vld [vmem:[#allocation12 + $0x18] sm:$0xff]
    %v315 = vld [vmem:[#allocation12 + $0x20] sm:$0xff]
    %v316 = vld [vmem:[#allocation12 + $0x28] sm:$0xff]
    %v317 = vld [vmem:[#allocation12 + $0x30] sm:$0xff]
    %v318 = vld [vmem:[#allocation12 + $0x38] sm:$0xff]
    %v319 = vld [vmem:[#allocation12 + $0x40] sm:$0xff]
    %v320 = vld [vmem:[#allocation12 + $0x48] sm:$0xff]
    %v321 = vld [vmem:[#allocation12 + $0x50] sm:$0xff]
    %v322 = vld [vmem:[#allocation12 + $0x58] sm:$0xff]
    %v323 = vld [vmem:[#allocation12 + $0x60] sm:$0xff]
    %v324 = vld [vmem:[#allocation12 + $0x68] sm:$0xff]
    %v325 = vld [vmem:[#allocation12 + $0x70] sm:$0xff]
    %v326 = vld [vmem:[#allocation12 + $0x78] sm:$0xff]
    %v327 = vpack.c.bf16 %v296, %v295
    %v328 = vpack.c.bf16 %v298, %v297
    %v329 = vpack.c.bf16 %v300, %v299
    %v330 = vpack.c.bf16 %v302, %v301
    %v331 = vpack.c.bf16 %v304, %v303
    %v332 = vpack.c.bf16 %v306, %v305
    %v333 = vpack.c.bf16 %v308, %v307
    %v334 = vpack.c.bf16 %v310, %v309
    %v351 = vunpack.c.l.b16 %v311
    %v352 = vunpack.c.h.b16 %v311
    %v353 = vunpack.c.l.b16 %v312
    %v354 = vunpack.c.h.b16 %v312
    %v355 = vunpack.c.l.b16 %v313
    %v356 = vunpack.c.h.b16 %v313
    %v357 = vunpack.c.l.b16 %v314
    %v358 = vunpack.c.h.b16 %v314
    %v359 = vunpack.c.l.b16 %v315
    %v360 = vunpack.c.h.b16 %v315
    %v361 = vunpack.c.l.b16 %v316
    %v362 = vunpack.c.h.b16 %v316
    %v363 = vunpack.c.l.b16 %v317
    %v364 = vunpack.c.h.b16 %v317
    %v365 = vunpack.c.l.b16 %v318
    %v366 = vunpack.c.h.b16 %v318
    %v367 = vunpack.c.l.b16 %v319
    %v368 = vunpack.c.h.b16 %v319
    %v369 = vunpack.c.l.b16 %v320
    %v370 = vunpack.c.h.b16 %v320
    %v371 = vunpack.c.l.b16 %v321
    %v372 = vunpack.c.h.b16 %v321
    %v373 = vunpack.c.l.b16 %v322
    %v374 = vunpack.c.h.b16 %v322
    %v375 = vunpack.c.l.b16 %v323
    %v376 = vunpack.c.h.b16 %v323
    %v377 = vunpack.c.l.b16 %v324
    %v378 = vunpack.c.h.b16 %v324
    %v379 = vunpack.c.l.b16 %v325
    %v380 = vunpack.c.h.b16 %v325
    %v381 = vunpack.c.l.b16 %v326
    %v382 = vunpack.c.h.b16 %v326
    %v383 = vpack.c.b16 %v353, %v351
    %v384 = vpack.c.b16 %v354, %v352
    %v385 = vpack.c.b16 %v357, %v355
    %v386 = vpack.c.b16 %v358, %v356
    %v387 = vpack.c.b16 %v361, %v359
    %v388 = vpack.c.b16 %v362, %v360
    %v389 = vpack.c.b16 %v365, %v363
    %v390 = vpack.c.b16 %v366, %v364
    %v391 = vpack.c.b16 %v369, %v367
    %v392 = vpack.c.b16 %v370, %v368
    %v393 = vpack.c.b16 %v373, %v371
    %v394 = vpack.c.b16 %v374, %v372
    %v395 = vpack.c.b16 %v377, %v375
    %v396 = vpack.c.b16 %v378, %v376
    %v397 = vpack.c.b16 %v381, %v379
    %v398 = vpack.c.b16 %v382, %v380
    %415 = vmatprep.subr.bf16.mxu0 %v384
    %416 = vmatpush1.bf16.msra.mxu0 %v383
    %417 = vmatprep.subr.bf16.mxu0 %v386
    %418 = vmatpush1.bf16.msra.mxu0 %v385
    %419 = vmatprep.subr.bf16.mxu0 %v388
    %420 = vmatpush1.bf16.msra.mxu0 %v387
    %421 = vmatprep.subr.bf16.mxu0 %v390
    %422 = vmatpush1.bf16.msra.mxu0 %v389
    %423 = vmatprep.subr.bf16.mxu0 %v392
    %424 = vmatpush1.bf16.msra.mxu0 %v391
    %425 = vmatprep.subr.bf16.mxu0 %v394
    %426 = vmatpush1.bf16.msra.mxu0 %v393
    %427 = vmatprep.subr.bf16.mxu0 %v396
    %428 = vmatpush1.bf16.msra.mxu0 %v395
    %429 = vmatprep.subr.bf16.mxu0 %v398
    %430 = vmatpush1.bf16.msra.mxu0 %v397
    %431 = vmatprep.subr.bf16.mxu0 0
    %432 = vmatpush1.bf16.msra.mxu0 0
    %433 = vmatprep.subr.bf16.mxu0 0
    %434 = vmatpush1.bf16.msra.mxu0 0
    %435 = vmatprep.subr.bf16.mxu0 0
    %436 = vmatpush1.bf16.msra.mxu0 0
    %437 = vmatprep.subr.bf16.mxu0 0
    %438 = vmatpush1.bf16.msra.mxu0 0
    %439 = vmatprep.subr.bf16.mxu0 0
    %440 = vmatpush1.bf16.msra.mxu0 0
    %441 = vmatprep.subr.bf16.mxu0 0
    %442 = vmatpush1.bf16.msra.mxu0 0
    %443 = vmatprep.subr.bf16.mxu0 0
    %444 = vmatpush1.bf16.msra.mxu0 0
    %445 = vmatprep.subr.bf16.mxu0 0
    %446 = vmatpush1.bf16.msra.mxu0 0
    %447 = vmatprep.mubr.bf16.mxu0 0
    %448 = vmatmul.mubr.bf16.gmra.mrb[0].mxu0 %v327
    %v449 = vpop.f32.mrb[0].mxu0
    %v450 = vadd.f32 0.0, %v449
    %v451 = vpop.f32.mrb[0].mxu0
    %v452 = vadd.f32 0.0, %v451
    %v453 = vpop.f32.mrb[0].mxu0
    %v454 = vadd.f32 0.0, %v453
    %v455 = vpop.f32.mrb[0].mxu0
    %v456 = vadd.f32 0.0, %v455
    %457 = vmatprep.mubr.bf16.mxu0 0
    %458 = vmatmul.mubr.bf16.gmra.mrb[0].mxu0 %v328
    %v459 = vpop.f32.mrb[0].mxu0
    %v460 = vadd.f32 0.0, %v459
    %v461 = vpop.f32.mrb[0].mxu0
    %v462 = vadd.f32 0.0, %v461
    %v463 = vpop.f32.mrb[0].mxu0
    %v464 = vadd.f32 0.0, %v463
    %v465 = vpop.f32.mrb[0].mxu0
    %v466 = vadd.f32 0.0, %v465
    %467 = vmatprep.mubr.bf16.mxu0 0
    %468 = vmatmul.mubr.bf16.gmra.mrb[0].mxu0 %v329
    %v469 = vpop.f32.mrb[0].mxu0
    %v470 = vadd.f32 0.0, %v469
    %v471 = vpop.f32.mrb[0].mxu0
    %v472 = vadd.f32 0.0, %v471
    %v473 = vpop.f32.mrb[0].mxu0
    %v474 = vadd.f32 0.0, %v473
    %v475 = vpop.f32.mrb[0].mxu0
    %v476 = vadd.f32 0.0, %v475
    %477 = vmatprep.mubr.bf16.mxu0 0
    %478 = vmatmul.mubr.bf16.gmra.mrb[0].mxu0 %v330
    %v479 = vpop.f32.mrb[0].mxu0
    %v480 = vadd.f32 0.0, %v479
    %v481 = vpop.f32.mrb[0].mxu0
    %v482 = vadd.f32 0.0, %v481
    %v483 = vpop.f32.mrb[0].mxu0
    %v484 = vadd.f32 0.0, %v483
    %v485 = vpop.f32.mrb[0].mxu0
    %v486 = vadd.f32 0.0, %v485
    %487 = vmatprep.mubr.bf16.mxu0 0
    %488 = vmatmul.mubr.bf16.gmra.mrb[0].mxu0 %v331
    %v489 = vpop.f32.mrb[0].mxu0
    %v490 = vadd.f32 0.0, %v489
    %v491 = vpop.f32.mrb[0].mxu0
    %v492 = vadd.f32 0.0, %v491
    %v493 = vpop.f32.mrb[0].mxu0
    %v494 = vadd.f32 0.0, %v493
    %v495 = vpop.f32.mrb[0].mxu0
    %v496 = vadd.f32 0.0, %v495
    %497 = vmatprep.mubr.bf16.mxu0 0
    %498 = vmatmul.mubr.bf16.gmra.mrb[0].mxu0 %v332
    %v499 = vpop.f32.mrb[0].mxu0
    %v500 = vadd.f32 0.0, %v499
    %v501 = vpop.f32.mrb[0].mxu0
    %v502 = vadd.f32 0.0, %v501
    %v503 = vpop.f32.mrb[0].mxu0
    %v504 = vadd.f32 0.0, %v503
    %v505 = vpop.f32.mrb[0].mxu0
    %v506 = vadd.f32 0.0, %v505
    %507 = vmatprep.mubr.bf16.mxu0 0
    %508 = vmatmul.mubr.bf16.gmra.mrb[0].mxu0 %v333
    %v509 = vpop.f32.mrb[0].mxu0
    %v510 = vadd.f32 0.0, %v509
    %v511 = vpop.f32.mrb[0].mxu0
    %v512 = vadd.f32 0.0, %v511
    %v513 = vpop.f32.mrb[0].mxu0
    %v514 = vadd.f32 0.0, %v513
    %v515 = vpop.f32.mrb[0].mxu0
    %v516 = vadd.f32 0.0, %v515
    %517 = vmatprep.mubr.bf16.mxu0 0
    %518 = vmatmul.mubr.bf16.gmra.mrb[0].mxu0 %v334
    %v519 = vpop.f32.mrb[0].mxu0
    %v520 = vadd.f32 0.0, %v519
    %v521 = vpop.f32.mrb[0].mxu0
    %v522 = vadd.f32 0.0, %v521
    %v523 = vpop.f32.mrb[0].mxu0
    %v524 = vadd.f32 0.0, %v523
    %v525 = vpop.f32.mrb[0].mxu0
    %v526 = vadd.f32 0.0, %v525
    %527 = vdwg.mxu0
    %528 = vst [vmem:[#allocation3] sm:$0xff] 0.0
    %529 = vst [vmem:[#allocation3 + $0x8] sm:$0xff] 0.0
    %530 = vst [vmem:[#allocation3 + $0x10] sm:$0xff] 0.0
    %531 = vst [vmem:[#allocation3 + $0x18] sm:$0xff] 0.0
    %532 = vst [vmem:[#allocation3 + $0x20] sm:$0xff] 0.0
    %533 = vst [vmem:[#allocation3 + $0x28] sm:$0xff] 0.0
    %534 = vst [vmem:[#allocation3 + $0x30] sm:$0xff] 0.0
    %535 = vst [vmem:[#allocation3 + $0x38] sm:$0xff] 0.0
    %536 = vst [vmem:[#allocation3 + $0x40] sm:$0xff] 0.0
    %537 = vst [vmem:[#allocation3 + $0x48] sm:$0xff] 0.0
    %538 = vst [vmem:[#allocation3 + $0x50] sm:$0xff] 0.0
    %539 = vst [vmem:[#allocation3 + $0x58] sm:$0xff] 0.0
    %540 = vst [vmem:[#allocation3 + $0x60] sm:$0xff] 0.0
    %541 = vst [vmem:[#allocation3 + $0x68] sm:$0xff] 0.0
    %542 = vst [vmem:[#allocation3 + $0x70] sm:$0xff] 0.0
    %543 = vst [vmem:[#allocation3 + $0x78] sm:$0xff] 0.0
    loop: start=0, step=1, limit=32
    $region90: #{tpu_custom_call.1} parent=1 // loop_pre_header
      _
    $region91: #{tpu_custom_call.1} parent=1 // loop_header
      %s545 = sphi 0, %s549
      %p546 = scmp.ge.s32.totalorder %s545, 32
    $region92: #{tpu_custom_call.1} parent=1 // loop_header_branch
      %548 = sbr.rel (%p546) target = $region96
    $region93: #{tpu_custom_call.1} parent=1 // loop_body
      %s550 = sld [smem:[#allocation10 + %s545]]
      %s551 = scalar_lea.vmem [#allocation2], %s550
      %v552 = vld [vmem:[%s551] sm:$0x1]
      %s553 = scalar_lea.vmem [#allocation3], %s545
      %554 = vst [vmem:[%s553] sm:$0x1] %v552
    $region94: #{tpu_custom_call.1} parent=1 // loop_footer
      %s549 = sadd.s32 1, %s545
    $region95: #{tpu_custom_call.1} parent=1 // loop_footer_branch
      %544 = sbr.rel target = $region91
    $region96: #{tpu_custom_call.1} parent=1 // loop_exit
      _
    %v555 = vld [vmem:[%s7] sm:$0x1]
    %v557 = vlaneseq
    %v558 = vshrl.u32 %v557, 7
    %v559 = vsub.s32 0, %v558
    %v560 = vrot.slane %v555, %v559
    %v562 = vadd.f32 %v450, %v560
    %v563 = vadd.f32 %v454, %v560
    %v564 = vadd.f32 %v460, %v560
    %v565 = vadd.f32 %v464, %v560
    %v566 = vadd.f32 %v470, %v560
    %v567 = vadd.f32 %v474, %v560
    %v568 = vadd.f32 %v480, %v560
    %v569 = vadd.f32 %v484, %v560
    %v570 = vadd.f32 %v490, %v560
    %v571 = vadd.f32 %v494, %v560
    %v572 = vadd.f32 %v500, %v560
    %v573 = vadd.f32 %v504, %v560
    %v574 = vadd.f32 %v510, %v560
    %v575 = vadd.f32 %v514, %v560
    %v576 = vadd.f32 %v520, %v560
    %v577 = vadd.f32 %v524, %v560
    %v578 = vld [vmem:[#allocation3] sm:$0xff]
    %v579 = vld [vmem:[#allocation3 + $0x8] sm:$0xff]
    %v580 = vld [vmem:[#allocation3 + $0x10] sm:$0xff]
    %v581 = vld [vmem:[#allocation3 + $0x18] sm:$0xff]
    %v582 = vld [vmem:[#allocation3 + $0x20] sm:$0xff]
    %v583 = vld [vmem:[#allocation3 + $0x28] sm:$0xff]
    %v584 = vld [vmem:[#allocation3 + $0x30] sm:$0xff]
    %v585 = vld [vmem:[#allocation3 + $0x38] sm:$0xff]
    %v586 = vld [vmem:[#allocation3 + $0x40] sm:$0xff]
    %v587 = vld [vmem:[#allocation3 + $0x48] sm:$0xff]
    %v588 = vld [vmem:[#allocation3 + $0x50] sm:$0xff]
    %v589 = vld [vmem:[#allocation3 + $0x58] sm:$0xff]
    %v590 = vld [vmem:[#allocation3 + $0x60] sm:$0xff]
    %v591 = vld [vmem:[#allocation3 + $0x68] sm:$0xff]
    %v592 = vld [vmem:[#allocation3 + $0x70] sm:$0xff]
    %v593 = vld [vmem:[#allocation3 + $0x78] sm:$0xff]
    %v594 = vadd.f32 %v578, %v562
    %v595 = vadd.f32 %v579, %v563
    %v596 = vadd.f32 %v580, %v564
    %v597 = vadd.f32 %v581, %v565
    %v598 = vadd.f32 %v582, %v566
    %v599 = vadd.f32 %v583, %v567
    %v600 = vadd.f32 %v584, %v568
    %v601 = vadd.f32 %v585, %v569
    %v602 = vadd.f32 %v586, %v570
    %v603 = vadd.f32 %v587, %v571
    %v604 = vadd.f32 %v588, %v572
    %v605 = vadd.f32 %v589, %v573
    %v606 = vadd.f32 %v590, %v574
    %v607 = vadd.f32 %v591, %v575
    %v608 = vadd.f32 %v592, %v576
    %v609 = vadd.f32 %v593, %v577
    %v610 = vmax.f32 %v594, 0.0
    %v611 = vmax.f32 %v595, 0.0
    %v612 = vmax.f32 %v596, 0.0
    %v613 = vmax.f32 %v597, 0.0
    %v614 = vmax.f32 %v598, 0.0
    %v615 = vmax.f32 %v599, 0.0
    %v616 = vmax.f32 %v600, 0.0
    %v617 = vmax.f32 %v601, 0.0
    %v618 = vmax.f32 %v602, 0.0
    %v619 = vmax.f32 %v603, 0.0
    %v620 = vmax.f32 %v604, 0.0
    %v621 = vmax.f32 %v605, 0.0
    %v622 = vmax.f32 %v606, 0.0
    %v623 = vmax.f32 %v607, 0.0
    %v624 = vmax.f32 %v608, 0.0
    %v625 = vmax.f32 %v609, 0.0
    %v626 = vpack.c.bf16 %v611, %v610
    %v627 = vpack.c.bf16 %v613, %v612
    %v628 = vpack.c.bf16 %v615, %v614
    %v629 = vpack.c.bf16 %v617, %v616
    %v630 = vpack.c.bf16 %v619, %v618
    %v631 = vpack.c.bf16 %v621, %v620
    %v632 = vpack.c.bf16 %v623, %v622
    %v633 = vpack.c.bf16 %v625, %v624
    %634 = vmatprep.subr.bf16.mxu0 0
    %635 = vmatpush1.bf16.msra.mxu0 %v626
    %636 = vmatprep.subr.bf16.mxu0 0
    %637 = vmatpush1.bf16.msra.mxu0 %v627
    %638 = vmatprep.subr.bf16.mxu0 0
    %639 = vmatpush1.bf16.msra.mxu0 %v628
    %640 = vmatprep.subr.bf16.mxu0 0
    %641 = vmatpush1.bf16.msra.mxu0 %v629
    %642 = vmatprep.subr.bf16.mxu0 0
    %643 = vmatpush1.bf16.msra.mxu0 %v630
    %644 = vmatprep.subr.bf16.mxu0 0
    %645 = vmatpush1.bf16.msra.mxu0 %v631
    %646 = vmatprep.subr.bf16.mxu0 0
    %647 = vmatpush1.bf16.msra.mxu0 %v632
    %648 = vmatprep.subr.bf16.mxu0 0
    %649 = vmatpush1.bf16.msra.mxu0 %v633
    %650 = vmatprep.subr.bf16.mxu0 0
    %651 = vmatpush1.bf16.msra.mxu0 0
    %652 = vmatprep.subr.bf16.mxu0 0
    %653 = vmatpush1.bf16.msra.mxu0 0
    %654 = vmatprep.subr.bf16.mxu0 0
    %655 = vmatpush1.bf16.msra.mxu0 0
    %656 = vmatprep.subr.bf16.mxu0 0
    %657 = vmatpush1.bf16.msra.mxu0 0
    %658 = vmatprep.subr.bf16.mxu0 0
    %659 = vmatpush1.bf16.msra.mxu0 0
    %660 = vmatprep.subr.bf16.mxu0 0
    %661 = vmatpush1.bf16.msra.mxu0 0
    %662 = vmatprep.subr.bf16.mxu0 0
    %663 = vmatpush1.bf16.msra.mxu0 0
    %664 = vmatprep.subr.bf16.mxu0 0
    %665 = vmatpush1.bf16.msra.mxu0 0
    %666 = vmatprep.mubr.bf16.mxu0 0
    %667 = vmatmul.mubr.bf16.gmra.mrb[0].mxu0 %v294
    %v668 = vpop.f32.mrb[0].mxu0
    %v669 = vadd.f32 0.0, %v668
    %v670 = vpop.f32.mrb[0].mxu0
    %v671 = vpop.f32.mrb[0].mxu0
    %v672 = vadd.f32 0.0, %v671
    %v673 = vpop.f32.mrb[0].mxu0
    %674 = vdwg.mxu0
    %v675 = vld [vmem:[#allocation2] sm:$0xff]
    %v676 = vld [vmem:[#allocation2 + $0x8] sm:$0xff]
    %v677 = vadd.f32 %v675, %v669
    %v678 = vadd.f32 %v676, %v672
    %v679 = vld [vmem:[#allocation14] sm:$0xf]
    %v680 = vld [vmem:[#allocation14 + $0x4] sm:$0xf]
    %v681 = vld [vmem:[#allocation14 + $0x8] sm:$0xf]
    %v682 = vld [vmem:[#allocation14 + $0xc] sm:$0xf]
    %v683 = vld [vmem:[#allocation14 + $0x10] sm:$0xf]
    %v684 = vld [vmem:[#allocation14 + $0x14] sm:$0xf]
    %v685 = vld [vmem:[#allocation14 + $0x18] sm:$0xf]
    %v686 = vld [vmem:[#allocation14 + $0x1c] sm:$0xf]
    %v687 = vld [vmem:[#allocation14 + $0x20] sm:$0xf]
    %v688 = vld [vmem:[#allocation14 + $0x24] sm:$0xf]
    %v689 = vld [vmem:[#allocation14 + $0x28] sm:$0xf]
    %v690 = vld [vmem:[#allocation14 + $0x2c] sm:$0xf]
    %v691 = vld [vmem:[#allocation14 + $0x30] sm:$0xf]
    %v692 = vld [vmem:[#allocation14 + $0x34] sm:$0xf]
    %v693 = vld [vmem:[#allocation14 + $0x38] sm:$0xf]
    %v694 = vld [vmem:[#allocation14 + $0x3c] sm:$0xf]
    %v695 = vpack.c.bf16 %v678, %v677
    %v696 = vld [vmem:[%s9] sm:$0x1]
    %v698 = vlaneseq
    %v699 = vshrl.u32 %v698, 7
    %v700 = vsub.s32 0, %v699
    %v701 = vrot.slane %v696, %v700
    %v719 = vunpack.c.l.b16 %v679
    %v720 = vunpack.c.l.b16 %v680
    %v721 = vunpack.c.l.b16 %v681
    %v722 = vunpack.c.l.b16 %v682
    %v723 = vunpack.c.l.b16 %v683
    %v724 = vunpack.c.l.b16 %v684
    %v725 = vunpack.c.l.b16 %v685
    %v726 = vunpack.c.l.b16 %v686
    %v727 = vunpack.c.l.b16 %v687
    %v728 = vunpack.c.l.b16 %v688
    %v729 = vunpack.c.l.b16 %v689
    %v730 = vunpack.c.l.b16 %v690
    %v731 = vunpack.c.l.b16 %v691
    %v732 = vunpack.c.l.b16 %v692
    %v733 = vunpack.c.l.b16 %v693
    %v734 = vunpack.c.l.b16 %v694
    %v735 = vpack.c.b16 %v720, %v719
    %v736 = vpack.c.b16 %v722, %v721
    %v737 = vpack.c.b16 %v724, %v723
    %v738 = vpack.c.b16 %v726, %v725
    %v739 = vpack.c.b16 %v728, %v727
    %v740 = vpack.c.b16 %v730, %v729
    %v741 = vpack.c.b16 %v732, %v731
    %v742 = vpack.c.b16 %v734, %v733
    %751 = vmatprep.subr.bf16.mxu0 0
    %752 = vmatpush1.bf16.msra.mxu0 %v735
    %753 = vmatprep.subr.bf16.mxu0 0
    %754 = vmatpush1.bf16.msra.mxu0 %v736
    %755 = vmatprep.subr.bf16.mxu0 0
    %756 = vmatpush1.bf16.msra.mxu0 %v737
    %757 = vmatprep.subr.bf16.mxu0 0
    %758 = vmatpush1.bf16.msra.mxu0 %v738
    %759 = vmatprep.subr.bf16.mxu0 0
    %760 = vmatpush1.bf16.msra.mxu0 %v739
    %761 = vmatprep.subr.bf16.mxu0 0
    %762 = vmatpush1.bf16.msra.mxu0 %v740
    %763 = vmatprep.subr.bf16.mxu0 0
    %764 = vmatpush1.bf16.msra.mxu0 %v741
    %765 = vmatprep.subr.bf16.mxu0 0
    %766 = vmatpush1.bf16.msra.mxu0 %v742
    %767 = vmatprep.subr.bf16.mxu0 0
    %768 = vmatpush1.bf16.msra.mxu0 0
    %769 = vmatprep.subr.bf16.mxu0 0
    %770 = vmatpush1.bf16.msra.mxu0 0
    %771 = vmatprep.subr.bf16.mxu0 0
    %772 = vmatpush1.bf16.msra.mxu0 0
    %773 = vmatprep.subr.bf16.mxu0 0
    %774 = vmatpush1.bf16.msra.mxu0 0
    %775 = vmatprep.subr.bf16.mxu0 0
    %776 = vmatpush1.bf16.msra.mxu0 0
    %777 = vmatprep.subr.bf16.mxu0 0
    %778 = vmatpush1.bf16.msra.mxu0 0
    %779 = vmatprep.subr.bf16.mxu0 0
    %780 = vmatpush1.bf16.msra.mxu0 0
    %781 = vmatprep.subr.bf16.mxu0 0
    %782 = vmatpush1.bf16.msra.mxu0 0
    %783 = vmatprep.mubr.bf16.mxu0 0
    %784 = vmatmul.mubr.bf16.gmra.mrb[0].mxu0 %v695
    %v785 = vpop.f32.mrb[0].mxu0
    %v786 = vadd.f32 %v701, %v785
    %v787 = vpop.f32.mrb[0].mxu0
    %v788 = vpop.f32.mrb[0].mxu0
    %v789 = vadd.f32 %v701, %v788
    %v790 = vpop.f32.mrb[0].mxu0
    %791 = vdwg.mxu0
    %vm792 = vcmp.ge.f32.partialorder %v786, 0.0
    %vm793 = vcmp.ge.f32.partialorder %v789, 0.0
    %v794 = vmul.f32 %v786, 0.01
    %v795 = vmul.f32 %v789, 0.01
    %v796 = vsel %vm792, %v786, %v794
    %v797 = vsel %vm793, %v789, %v795
    %v798 = vld [vmem:[#allocation15] sm:$0xf]
    %v799 = vld [vmem:[#allocation15 + $0x4] sm:$0xf]
    %v800 = vld [vmem:[#allocation15 + $0x8] sm:$0xf]
    %v801 = vld [vmem:[#allocation15 + $0xc] sm:$0xf]
    %v802 = vld [vmem:[#allocation15 + $0x10] sm:$0xf]
    %v803 = vld [vmem:[#allocation15 + $0x14] sm:$0xf]
    %v804 = vld [vmem:[#allocation15 + $0x18] sm:$0xf]
    %v805 = vld [vmem:[#allocation15 + $0x1c] sm:$0xf]
    %v806 = vld [vmem:[#allocation15 + $0x20] sm:$0xf]
    %v807 = vld [vmem:[#allocation15 + $0x24] sm:$0xf]
    %v808 = vld [vmem:[#allocation15 + $0x28] sm:$0xf]
    %v809 = vld [vmem:[#allocation15 + $0x2c] sm:$0xf]
    %v810 = vld [vmem:[#allocation15 + $0x30] sm:$0xf]
    %v811 = vld [vmem:[#allocation15 + $0x34] sm:$0xf]
    %v812 = vld [vmem:[#allocation15 + $0x38] sm:$0xf]
    %v813 = vld [vmem:[#allocation15 + $0x3c] sm:$0xf]
    %v814 = vpack.c.bf16 %v797, %v796
    %v815 = vld [vmem:[%s11] sm:$0x1]
    %v817 = vlaneseq
    %v818 = vshrl.u32 %v817, 7
    %v819 = vsub.s32 0, %v818
    %v820 = vrot.slane %v815, %v819
    %v838 = vunpack.c.l.b16 %v798
    %v839 = vunpack.c.l.b16 %v799
    %v840 = vunpack.c.l.b16 %v800
    %v841 = vunpack.c.l.b16 %v801
    %v842 = vunpack.c.l.b16 %v802
    %v843 = vunpack.c.l.b16 %v803
    %v844 = vunpack.c.l.b16 %v804
    %v845 = vunpack.c.l.b16 %v805
    %v846 = vunpack.c.l.b16 %v806
    %v847 = vunpack.c.l.b16 %v807
    %v848 = vunpack.c.l.b16 %v808
    %v849 = vunpack.c.l.b16 %v809
    %v850 = vunpack.c.l.b16 %v810
    %v851 = vunpack.c.l.b16 %v811
    %v852 = vunpack.c.l.b16 %v812
    %v853 = vunpack.c.l.b16 %v813
    %v854 = vpack.c.b16 %v839, %v838
    %v855 = vpack.c.b16 %v841, %v840
    %v856 = vpack.c.b16 %v843, %v842
    %v857 = vpack.c.b16 %v845, %v844
    %v858 = vpack.c.b16 %v847, %v846
    %v859 = vpack.c.b16 %v849, %v848
    %v860 = vpack.c.b16 %v851, %v850
    %v861 = vpack.c.b16 %v853, %v852
    %870 = vmatprep.subr.bf16.mxu0 0
    %871 = vmatpush1.bf16.msra.mxu0 %v854
    %872 = vmatprep.subr.bf16.mxu0 0
    %873 = vmatpush1.bf16.msra.mxu0 %v855
    %874 = vmatprep.subr.bf16.mxu0 0
    %875 = vmatpush1.bf16.msra.mxu0 %v856
    %876 = vmatprep.subr.bf16.mxu0 0
    %877 = vmatpush1.bf16.msra.mxu0 %v857
    %878 = vmatprep.subr.bf16.mxu0 0
    %879 = vmatpush1.bf16.msra.mxu0 %v858
    %880 = vmatprep.subr.bf16.mxu0 0
    %881 = vmatpush1.bf16.msra.mxu0 %v859
    %882 = vmatprep.subr.bf16.mxu0 0
    %883 = vmatpush1.bf16.msra.mxu0 %v860
    %884 = vmatprep.subr.bf16.mxu0 0
    %885 = vmatpush1.bf16.msra.mxu0 %v861
    %886 = vmatprep.subr.bf16.mxu0 0
    %887 = vmatpush1.bf16.msra.mxu0 0
    %888 = vmatprep.subr.bf16.mxu0 0
    %889 = vmatpush1.bf16.msra.mxu0 0
    %890 = vmatprep.subr.bf16.mxu0 0
    %891 = vmatpush1.bf16.msra.mxu0 0
    %892 = vmatprep.subr.bf16.mxu0 0
    %893 = vmatpush1.bf16.msra.mxu0 0
    %894 = vmatprep.subr.bf16.mxu0 0
    %895 = vmatpush1.bf16.msra.mxu0 0
    %896 = vmatprep.subr.bf16.mxu0 0
    %897 = vmatpush1.bf16.msra.mxu0 0
    %898 = vmatprep.subr.bf16.mxu0 0
    %899 = vmatpush1.bf16.msra.mxu0 0
    %900 = vmatprep.subr.bf16.mxu0 0
    %901 = vmatpush1.bf16.msra.mxu0 0
    %902 = vmatprep.mubr.bf16.mxu0 0
    %903 = vmatmul.mubr.bf16.gmra.mrb[0].mxu0 %v814
    %v904 = vpop.f32.mrb[0].mxu0
    %v905 = vadd.f32 %v820, %v904
    %v906 = vpop.f32.mrb[0].mxu0
    %v907 = vpop.f32.mrb[0].mxu0
    %v908 = vadd.f32 %v820, %v907
    %v909 = vpop.f32.mrb[0].mxu0
    %910 = vdwg.mxu0
    %v911 = vtanh.pop %v905
    %v912 = vtanh.pop %v908
    %913 = vst [vmem:[#allocation2] sm:$0xff] %v911
    %914 = vst [vmem:[#allocation2 + $0x8] sm:$0xff] %v912
    loop: start=0, step=1, limit=32
    $region97: #{tpu_custom_call.1} parent=1 // loop_pre_header
      _
    $region98: #{tpu_custom_call.1} parent=1 // loop_header
      %s916 = sphi 0, %s920
      %p917 = scmp.ge.s32.totalorder %s916, 32
    $region99: #{tpu_custom_call.1} parent=1 // loop_header_branch
      %919 = sbr.rel (%p917) target = $region103
    $region100: #{tpu_custom_call.1} parent=1 // loop_body
      %s921 = sld [smem:[#allocation10 + %s916]]
      %s922 = scalar_lea.vmem [#allocation2], %s921
      %v923 = vld [vmem:[%s922] sm:$0x1]
      %s924 = scalar_lea.vmem [#allocation3], %s916
      %925 = vst [vmem:[%s924] sm:$0x1] %v923
    $region101: #{tpu_custom_call.1} parent=1 // loop_footer
      %s920 = sadd.s32 1, %s916
    $region102: #{tpu_custom_call.1} parent=1 // loop_footer_branch
      %915 = sbr.rel target = $region98
    $region103: #{tpu_custom_call.1} parent=1 // loop_exit
      _
    %s926 = scalar_lea.vmem %s7, 1
    %v927 = vld [vmem:[%s926] sm:$0x1]
    %v929 = vlaneseq
    %v930 = vshrl.u32 %v929, 7
    %v931 = vsub.s32 0, %v930
    %v932 = vrot.slane %v927, %v931
    %v934 = vadd.f32 %v452, %v932
    %v935 = vadd.f32 %v456, %v932
    %v936 = vadd.f32 %v462, %v932
    %v937 = vadd.f32 %v466, %v932
    %v938 = vadd.f32 %v472, %v932
    %v939 = vadd.f32 %v476, %v932
    %v940 = vadd.f32 %v482, %v932
    %v941 = vadd.f32 %v486, %v932
    %v942 = vadd.f32 %v492, %v932
    %v943 = vadd.f32 %v496, %v932
    %v944 = vadd.f32 %v502, %v932
    %v945 = vadd.f32 %v506, %v932
    %v946 = vadd.f32 %v512, %v932
    %v947 = vadd.f32 %v516, %v932
    %v948 = vadd.f32 %v522, %v932
    %v949 = vadd.f32 %v526, %v932
    %v950 = vld [vmem:[#allocation3] sm:$0xff]
    %v951 = vld [vmem:[#allocation3 + $0x8] sm:$0xff]
    %v952 = vld [vmem:[#allocation3 + $0x10] sm:$0xff]
    %v953 = vld [vmem:[#allocation3 + $0x18] sm:$0xff]
    %v954 = vld [vmem:[#allocation3 + $0x20] sm:$0xff]
    %v955 = vld [vmem:[#allocation3 + $0x28] sm:$0xff]
    %v956 = vld [vmem:[#allocation3 + $0x30] sm:$0xff]
    %v957 = vld [vmem:[#allocation3 + $0x38] sm:$0xff]
    %v958 = vld [vmem:[#allocation3 + $0x40] sm:$0xff]
    %v959 = vld [vmem:[#allocation3 + $0x48] sm:$0xff]
    %v960 = vld [vmem:[#allocation3 + $0x50] sm:$0xff]
    %v961 = vld [vmem:[#allocation3 + $0x58] sm:$0xff]
    %v962 = vld [vmem:[#allocation3 + $0x60] sm:$0xff]
    %v963 = vld [vmem:[#allocation3 + $0x68] sm:$0xff]
    %v964 = vld [vmem:[#allocation3 + $0x70] sm:$0xff]
    %v965 = vld [vmem:[#allocation3 + $0x78] sm:$0xff]
    %v966 = vadd.f32 %v950, %v934
    %v967 = vadd.f32 %v951, %v935
    %v968 = vadd.f32 %v952, %v936
    %v969 = vadd.f32 %v953, %v937
    %v970 = vadd.f32 %v954, %v938
    %v971 = vadd.f32 %v955, %v939
    %v972 = vadd.f32 %v956, %v940
    %v973 = vadd.f32 %v957, %v941
    %v974 = vadd.f32 %v958, %v942
    %v975 = vadd.f32 %v959, %v943
    %v976 = vadd.f32 %v960, %v944
    %v977 = vadd.f32 %v961, %v945
    %v978 = vadd.f32 %v962, %v946
    %v979 = vadd.f32 %v963, %v947
    %v980 = vadd.f32 %v964, %v948
    %v981 = vadd.f32 %v965, %v949
    %v982 = vmax.f32 %v966, 0.0
    %v983 = vmax.f32 %v967, 0.0
    %v984 = vmax.f32 %v968, 0.0
    %v985 = vmax.f32 %v969, 0.0
    %v986 = vmax.f32 %v970, 0.0
    %v987 = vmax.f32 %v971, 0.0
    %v988 = vmax.f32 %v972, 0.0
    %v989 = vmax.f32 %v973, 0.0
    %v990 = vmax.f32 %v974, 0.0
    %v991 = vmax.f32 %v975, 0.0
    %v992 = vmax.f32 %v976, 0.0
    %v993 = vmax.f32 %v977, 0.0
    %v994 = vmax.f32 %v978, 0.0
    %v995 = vmax.f32 %v979, 0.0
    %v996 = vmax.f32 %v980, 0.0
    %v997 = vmax.f32 %v981, 0.0
    %v998 = vpack.c.bf16 %v983, %v982
    %v999 = vpack.c.bf16 %v985, %v984
    %v1000 = vpack.c.bf16 %v987, %v986
    %v1001 = vpack.c.bf16 %v989, %v988
    %v1002 = vpack.c.bf16 %v991, %v990
    %v1003 = vpack.c.bf16 %v993, %v992
    %v1004 = vpack.c.bf16 %v995, %v994
    %v1005 = vpack.c.bf16 %v997, %v996
    %1006 = vmatprep.subr.bf16.mxu0 0
    %1007 = vmatpush1.bf16.msra.mxu0 %v998
    %1008 = vmatprep.subr.bf16.mxu0 0
    %1009 = vmatpush1.bf16.msra.mxu0 %v999
    %1010 = vmatprep.subr.bf16.mxu0 0
    %1011 = vmatpush1.bf16.msra.mxu0 %v1000
    %1012 = vmatprep.subr.bf16.mxu0 0
    %1013 = vmatpush1.bf16.msra.mxu0 %v1001
    %1014 = vmatprep.subr.bf16.mxu0 0
    %1015 = vmatpush1.bf16.msra.mxu0 %v1002
    %1016 = vmatprep.subr.bf16.mxu0 0
    %1017 = vmatpush1.bf16.msra.mxu0 %v1003
    %1018 = vmatprep.subr.bf16.mxu0 0
    %1019 = vmatpush1.bf16.msra.mxu0 %v1004
    %1020 = vmatprep.subr.bf16.mxu0 0
    %1021 = vmatpush1.bf16.msra.mxu0 %v1005
    %1022 = vmatprep.subr.bf16.mxu0 0
    %1023 = vmatpush1.bf16.msra.mxu0 0
    %1024 = vmatprep.subr.bf16.mxu0 0
    %1025 = vmatpush1.bf16.msra.mxu0 0
    %1026 = vmatprep.subr.bf16.mxu0 0
    %1027 = vmatpush1.bf16.msra.mxu0 0
    %1028 = vmatprep.subr.bf16.mxu0 0
    %1029 = vmatpush1.bf16.msra.mxu0 0
    %1030 = vmatprep.subr.bf16.mxu0 0
    %1031 = vmatpush1.bf16.msra.mxu0 0
    %1032 = vmatprep.subr.bf16.mxu0 0
    %1033 = vmatpush1.bf16.msra.mxu0 0
    %1034 = vmatprep.subr.bf16.mxu0 0
    %1035 = vmatpush1.bf16.msra.mxu0 0
    %1036 = vmatprep.subr.bf16.mxu0 0
    %1037 = vmatpush1.bf16.msra.mxu0 0
    %1038 = vmatprep.mubr.bf16.mxu0 0
    %1039 = vmatmul.mubr.bf16.gmra.mrb[0].mxu0 %v294
    %v1040 = vpop.f32.mrb[0].mxu0
    %v1041 = vadd.f32 0.0, %v1040
    %v1042 = vpop.f32.mrb[0].mxu0
    %v1043 = vpop.f32.mrb[0].mxu0
    %v1044 = vadd.f32 0.0, %v1043
    %v1045 = vpop.f32.mrb[0].mxu0
    %1046 = vdwg.mxu0
    %v1047 = vld [vmem:[#allocation2] sm:$0xff]
    %v1048 = vld [vmem:[#allocation2 + $0x8] sm:$0xff]
    %v1049 = vadd.f32 %v1047, %v1041
    %v1050 = vadd.f32 %v1048, %v1044
    %s1051 = scalar_lea.vmem [#allocation14], 64
    %v1052 = vld [vmem:[%s1051] sm:$0xf]
    %v1053 = vld [vmem:[%s1051 + $0x4] sm:$0xf]
    %v1054 = vld [vmem:[%s1051 + $0x8] sm:$0xf]
    %v1055 = vld [vmem:[%s1051 + $0xc] sm:$0xf]
    %v1056 = vld [vmem:[%s1051 + $0x10] sm:$0xf]
    %v1057 = vld [vmem:[%s1051 + $0x14] sm:$0xf]
    %v1058 = vld [vmem:[%s1051 + $0x18] sm:$0xf]
    %v1059 = vld [vmem:[%s1051 + $0x1c] sm:$0xf]
    %v1060 = vld [vmem:[%s1051 + $0x20] sm:$0xf]
    %v1061 = vld [vmem:[%s1051 + $0x24] sm:$0xf]
    %v1062 = vld [vmem:[%s1051 + $0x28] sm:$0xf]
    %v1063 = vld [vmem:[%s1051 + $0x2c] sm:$0xf]
    %v1064 = vld [vmem:[%s1051 + $0x30] sm:$0xf]
    %v1065 = vld [vmem:[%s1051 + $0x34] sm:$0xf]
    %v1066 = vld [vmem:[%s1051 + $0x38] sm:$0xf]
    %v1067 = vld [vmem:[%s1051 + $0x3c] sm:$0xf]
    %v1068 = vpack.c.bf16 %v1050, %v1049
    %s1069 = scalar_lea.vmem %s9, 1
    %v1070 = vld [vmem:[%s1069] sm:$0x1]
    %v1072 = vlaneseq
    %v1073 = vshrl.u32 %v1072, 7
    %v1074 = vsub.s32 0, %v1073
    %v1075 = vrot.slane %v1070, %v1074
    %v1093 = vunpack.c.l.b16 %v1052
    %v1094 = vunpack.c.l.b16 %v1053
    %v1095 = vunpack.c.l.b16 %v1054
    %v1096 = vunpack.c.l.b16 %v1055
    %v1097 = vunpack.c.l.b16 %v1056
    %v1098 = vunpack.c.l.b16 %v1057
    %v1099 = vunpack.c.l.b16 %v1058
    %v1100 = vunpack.c.l.b16 %v1059
    %v1101 = vunpack.c.l.b16 %v1060
    %v1102 = vunpack.c.l.b16 %v1061
    %v1103 = vunpack.c.l.b16 %v1062
    %v1104 = vunpack.c.l.b16 %v1063
    %v1105 = vunpack.c.l.b16 %v1064
    %v1106 = vunpack.c.l.b16 %v1065
    %v1107 = vunpack.c.l.b16 %v1066
    %v1108 = vunpack.c.l.b16 %v1067
    %v1109 = vpack.c.b16 %v1094, %v1093
    %v1110 = vpack.c.b16 %v1096, %v1095
    %v1111 = vpack.c.b16 %v1098, %v1097
    %v1112 = vpack.c.b16 %v1100, %v1099
    %v1113 = vpack.c.b16 %v1102, %v1101
    %v1114 = vpack.c.b16 %v1104, %v1103
    %v1115 = vpack.c.b16 %v1106, %v1105
    %v1116 = vpack.c.b16 %v1108, %v1107
    %1125 = vmatprep.subr.bf16.mxu0 0
    %1126 = vmatpush1.bf16.msra.mxu0 %v1109
    %1127 = vmatprep.subr.bf16.mxu0 0
    %1128 = vmatpush1.bf16.msra.mxu0 %v1110
    %1129 = vmatprep.subr.bf16.mxu0 0
    %1130 = vmatpush1.bf16.msra.mxu0 %v1111
    %1131 = vmatprep.subr.bf16.mxu0 0
    %1132 = vmatpush1.bf16.msra.mxu0 %v1112
    %1133 = vmatprep.subr.bf16.mxu0 0
    %1134 = vmatpush1.bf16.msra.mxu0 %v1113
    %1135 = vmatprep.subr.bf16.mxu0 0
    %1136 = vmatpush1.bf16.msra.mxu0 %v1114
    %1137 = vmatprep.subr.bf16.mxu0 0
    %1138 = vmatpush1.bf16.msra.mxu0 %v1115
    %1139 = vmatprep.subr.bf16.mxu0 0
    %1140 = vmatpush1.bf16.msra.mxu0 %v1116
    %1141 = vmatprep.subr.bf16.mxu0 0
    %1142 = vmatpush1.bf16.msra.mxu0 0
    %1143 = vmatprep.subr.bf16.mxu0 0
    %1144 = vmatpush1.bf16.msra.mxu0 0
    %1145 = vmatprep.subr.bf16.mxu0 0
    %1146 = vmatpush1.bf16.msra.mxu0 0
    %1147 = vmatprep.subr.bf16.mxu0 0
    %1148 = vmatpush1.bf16.msra.mxu0 0
    %1149 = vmatprep.subr.bf16.mxu0 0
    %1150 = vmatpush1.bf16.msra.mxu0 0
    %1151 = vmatprep.subr.bf16.mxu0 0
    %1152 = vmatpush1.bf16.msra.mxu0 0
    %1153 = vmatprep.subr.bf16.mxu0 0
    %1154 = vmatpush1.bf16.msra.mxu0 0
    %1155 = vmatprep.subr.bf16.mxu0 0
    %1156 = vmatpush1.bf16.msra.mxu0 0
    %1157 = vmatprep.mubr.bf16.mxu0 0
    %1158 = vmatmul.mubr.bf16.gmra.mrb[0].mxu0 %v1068
    %v1159 = vpop.f32.mrb[0].mxu0
    %v1160 = vadd.f32 %v1075, %v1159
    %v1161 = vpop.f32.mrb[0].mxu0
    %v1162 = vpop.f32.mrb[0].mxu0
    %v1163 = vadd.f32 %v1075, %v1162
    %v1164 = vpop.f32.mrb[0].mxu0
    %1165 = vdwg.mxu0
    %vm1166 = vcmp.ge.f32.partialorder %v1160, 0.0
    %vm1167 = vcmp.ge.f32.partialorder %v1163, 0.0
    %v1168 = vmul.f32 %v1160, 0.01
    %v1169 = vmul.f32 %v1163, 0.01
    %v1170 = vsel %vm1166, %v1160, %v1168
    %v1171 = vsel %vm1167, %v1163, %v1169
    %s1172 = scalar_lea.vmem [#allocation15], 64
    %v1173 = vld [vmem:[%s1172] sm:$0xf]
    %v1174 = vld [vmem:[%s1172 + $0x4] sm:$0xf]
    %v1175 = vld [vmem:[%s1172 + $0x8] sm:$0xf]
    %v1176 = vld [vmem:[%s1172 + $0xc] sm:$0xf]
    %v1177 = vld [vmem:[%s1172 + $0x10] sm:$0xf]
    %v1178 = vld [vmem:[%s1172 + $0x14] sm:$0xf]
    %v1179 = vld [vmem:[%s1172 + $0x18] sm:$0xf]
    %v1180 = vld [vmem:[%s1172 + $0x1c] sm:$0xf]
    %v1181 = vld [vmem:[%s1172 + $0x20] sm:$0xf]
    %v1182 = vld [vmem:[%s1172 + $0x24] sm:$0xf]
    %v1183 = vld [vmem:[%s1172 + $0x28] sm:$0xf]
    %v1184 = vld [vmem:[%s1172 + $0x2c] sm:$0xf]
    %v1185 = vld [vmem:[%s1172 + $0x30] sm:$0xf]
    %v1186 = vld [vmem:[%s1172 + $0x34] sm:$0xf]
    %v1187 = vld [vmem:[%s1172 + $0x38] sm:$0xf]
    %v1188 = vld [vmem:[%s1172 + $0x3c] sm:$0xf]
    %v1189 = vpack.c.bf16 %v1171, %v1170
    %s1190 = scalar_lea.vmem %s11, 1
    %v1191 = vld [vmem:[%s1190] sm:$0x1]
    %v1193 = vlaneseq
    %v1194 = vshrl.u32 %v1193, 7
    %v1195 = vsub.s32 0, %v1194
    %v1196 = vrot.slane %v1191, %v1195
    %v1214 = vunpack.c.l.b16 %v1173
    %v1215 = vunpack.c.l.b16 %v1174
    %v1216 = vunpack.c.l.b16 %v1175
    %v1217 = vunpack.c.l.b16 %v1176
    %v1218 = vunpack.c.l.b16 %v1177
    %v1219 = vunpack.c.l.b16 %v1178
    %v1220 = vunpack.c.l.b16 %v1179
    %v1221 = vunpack.c.l.b16 %v1180
    %v1222 = vunpack.c.l.b16 %v1181
    %v1223 = vunpack.c.l.b16 %v1182
    %v1224 = vunpack.c.l.b16 %v1183
    %v1225 = vunpack.c.l.b16 %v1184
    %v1226 = vunpack.c.l.b16 %v1185
    %v1227 = vunpack.c.l.b16 %v1186
    %v1228 = vunpack.c.l.b16 %v1187
    %v1229 = vunpack.c.l.b16 %v1188
    %v1230 = vpack.c.b16 %v1215, %v1214
    %v1231 = vpack.c.b16 %v1217, %v1216
    %v1232 = vpack.c.b16 %v1219, %v1218
    %v1233 = vpack.c.b16 %v1221, %v1220
    %v1234 = vpack.c.b16 %v1223, %v1222
    %v1235 = vpack.c.b16 %v1225, %v1224
    %v1236 = vpack.c.b16 %v1227, %v1226
    %v1237 = vpack.c.b16 %v1229, %v1228
    %1246 = vmatprep.subr.bf16.mxu0 0
    %1247 = vmatpush1.bf16.msra.mxu0 %v1230
    %1248 = vmatprep.subr.bf16.mxu0 0
    %1249 = vmatpush1.bf16.msra.mxu0 %v1231
    %1250 = vmatprep.subr.bf16.mxu0 0
    %1251 = vmatpush1.bf16.msra.mxu0 %v1232
    %1252 = vmatprep.subr.bf16.mxu0 0
    %1253 = vmatpush1.bf16.msra.mxu0 %v1233
    %1254 = vmatprep.subr.bf16.mxu0 0
    %1255 = vmatpush1.bf16.msra.mxu0 %v1234
    %1256 = vmatprep.subr.bf16.mxu0 0
    %1257 = vmatpush1.bf16.msra.mxu0 %v1235
    %1258 = vmatprep.subr.bf16.mxu0 0
    %1259 = vmatpush1.bf16.msra.mxu0 %v1236
    %1260 = vmatprep.subr.bf16.mxu0 0
    %1261 = vmatpush1.bf16.msra.mxu0 %v1237
    %1262 = vmatprep.subr.bf16.mxu0 0
    %1263 = vmatpush1.bf16.msra.mxu0 0
    %1264 = vmatprep.subr.bf16.mxu0 0
    %1265 = vmatpush1.bf16.msra.mxu0 0
    %1266 = vmatprep.subr.bf16.mxu0 0
    %1267 = vmatpush1.bf16.msra.mxu0 0
    %1268 = vmatprep.subr.bf16.mxu0 0
    %1269 = vmatpush1.bf16.msra.mxu0 0
    %1270 = vmatprep.subr.bf16.mxu0 0
    %1271 = vmatpush1.bf16.msra.mxu0 0
    %1272 = vmatprep.subr.bf16.mxu0 0
    %1273 = vmatpush1.bf16.msra.mxu0 0
    %1274 = vmatprep.subr.bf16.mxu0 0
    %1275 = vmatpush1.bf16.msra.mxu0 0
    %1276 = vmatprep.subr.bf16.mxu0 0
    %1277 = vmatpush1.bf16.msra.mxu0 0
    %1278 = vmatprep.mubr.bf16.mxu0 0
    %1279 = vmatmul.mubr.bf16.gmra.mrb[0].mxu0 %v1189
    %v1280 = vpop.f32.mrb[0].mxu0
    %v1281 = vadd.f32 %v1196, %v1280
    %v1282 = vpop.f32.mrb[0].mxu0
    %v1283 = vpop.f32.mrb[0].mxu0
    %v1284 = vadd.f32 %v1196, %v1283
    %v1285 = vpop.f32.mrb[0].mxu0
    %1286 = vdwg.mxu0
    %v1287 = vtanh.pop %v1281
    %v1288 = vtanh.pop %v1284
    %1289 = vst [vmem:[#allocation2] sm:$0xff] %v1287
    %1290 = vst [vmem:[#allocation2 + $0x8] sm:$0xff] %v1288
    %v1291 = vld [vmem:[#allocation2] sm:$0xff]
    %v1292 = vld [vmem:[#allocation2 + $0x8] sm:$0xff]
    %v1293 = vld [vmem:[#allocation17] sm:$0xf]
    %v1294 = vld [vmem:[#allocation17 + $0x4] sm:$0xf]
    %v1295 = vld [vmem:[#allocation17 + $0x8] sm:$0xf]
    %v1296 = vld [vmem:[#allocation17 + $0xc] sm:$0xf]
    %v1297 = vld [vmem:[#allocation17 + $0x10] sm:$0xf]
    %v1298 = vld [vmem:[#allocation17 + $0x14] sm:$0xf]
    %v1299 = vld [vmem:[#allocation17 + $0x18] sm:$0xf]
    %v1300 = vld [vmem:[#allocation17 + $0x1c] sm:$0xf]
    %v1301 = vld [vmem:[#allocation17 + $0x20] sm:$0xf]
    %v1302 = vld [vmem:[#allocation17 + $0x24] sm:$0xf]
    %v1303 = vld [vmem:[#allocation17 + $0x28] sm:$0xf]
    %v1304 = vld [vmem:[#allocation17 + $0x2c] sm:$0xf]
    %v1305 = vld [vmem:[#allocation17 + $0x30] sm:$0xf]
    %v1306 = vld [vmem:[#allocation17 + $0x34] sm:$0xf]
    %v1307 = vld [vmem:[#allocation17 + $0x38] sm:$0xf]
    %v1308 = vld [vmem:[#allocation17 + $0x3c] sm:$0xf]
    %v1309 = vpack.c.bf16 %v1292, %v1291
    %v1310 = vld [vmem:[%s13] sm:$0x1]
    %v1312 = vlaneseq
    %v1313 = vshrl.u32 %v1312, 7
    %v1314 = vsub.s32 0, %v1313
    %v1315 = vrot.slane %v1310, %v1314
    %v1333 = vunpack.c.l.b16 %v1293
    %v1334 = vunpack.c.l.b16 %v1294
    %v1335 = vunpack.c.l.b16 %v1295
    %v1336 = vunpack.c.l.b16 %v1296
    %v1337 = vunpack.c.l.b16 %v1297
    %v1338 = vunpack.c.l.b16 %v1298
    %v1339 = vunpack.c.l.b16 %v1299
    %v1340 = vunpack.c.l.b16 %v1300
    %v1341 = vunpack.c.l.b16 %v1301
    %v1342 = vunpack.c.l.b16 %v1302
    %v1343 = vunpack.c.l.b16 %v1303
    %v1344 = vunpack.c.l.b16 %v1304
    %v1345 = vunpack.c.l.b16 %v1305
    %v1346 = vunpack.c.l.b16 %v1306
    %v1347 = vunpack.c.l.b16 %v1307
    %v1348 = vunpack.c.l.b16 %v1308
    %v1349 = vpack.c.b16 %v1334, %v1333
    %v1350 = vpack.c.b16 %v1336, %v1335
    %v1351 = vpack.c.b16 %v1338, %v1337
    %v1352 = vpack.c.b16 %v1340, %v1339
    %v1353 = vpack.c.b16 %v1342, %v1341
    %v1354 = vpack.c.b16 %v1344, %v1343
    %v1355 = vpack.c.b16 %v1346, %v1345
    %v1356 = vpack.c.b16 %v1348, %v1347
    %1365 = vmatprep.subr.bf16.mxu0 0
    %1366 = vmatpush1.bf16.msra.mxu0 %v1349
    %1367 = vmatprep.subr.bf16.mxu0 0
    %1368 = vmatpush1.bf16.msra.mxu0 %v1350
    %1369 = vmatprep.subr.bf16.mxu0 0
    %1370 = vmatpush1.bf16.msra.mxu0 %v1351
    %1371 = vmatprep.subr.bf16.mxu0 0
    %1372 = vmatpush1.bf16.msra.mxu0 %v1352
    %1373 = vmatprep.subr.bf16.mxu0 0
    %1374 = vmatpush1.bf16.msra.mxu0 %v1353
    %1375 = vmatprep.subr.bf16.mxu0 0
    %1376 = vmatpush1.bf16.msra.mxu0 %v1354
    %1377 = vmatprep.subr.bf16.mxu0 0
    %1378 = vmatpush1.bf16.msra.mxu0 %v1355
    %1379 = vmatprep.subr.bf16.mxu0 0
    %1380 = vmatpush1.bf16.msra.mxu0 %v1356
    %1381 = vmatprep.subr.bf16.mxu0 0
    %1382 = vmatpush1.bf16.msra.mxu0 0
    %1383 = vmatprep.subr.bf16.mxu0 0
    %1384 = vmatpush1.bf16.msra.mxu0 0
    %1385 = vmatprep.subr.bf16.mxu0 0
    %1386 = vmatpush1.bf16.msra.mxu0 0
    %1387 = vmatprep.subr.bf16.mxu0 0
    %1388 = vmatpush1.bf16.msra.mxu0 0
    %1389 = vmatprep.subr.bf16.mxu0 0
    %1390 = vmatpush1.bf16.msra.mxu0 0
    %1391 = vmatprep.subr.bf16.mxu0 0
    %1392 = vmatpush1.bf16.msra.mxu0 0
    %1393 = vmatprep.subr.bf16.mxu0 0
    %1394 = vmatpush1.bf16.msra.mxu0 0
    %1395 = vmatprep.subr.bf16.mxu0 0
    %1396 = vmatpush1.bf16.msra.mxu0 0
    %1397 = vmatprep.mubr.bf16.mxu0 0
    %1398 = vmatmul.mubr.bf16.gmra.mrb[0].mxu0 %v1309
    %v1399 = vpop.f32.mrb[0].mxu0
    %v1400 = vadd.f32 %v1315, %v1399
    %v1401 = vpop.f32.mrb[0].mxu0
    %v1402 = vpop.f32.mrb[0].mxu0
    %v1403 = vadd.f32 %v1315, %v1402
    %v1404 = vpop.f32.mrb[0].mxu0
    %1405 = vdwg.mxu0
    %v1406 = vtanh.pop %v1400
    %v1407 = vtanh.pop %v1403
    %1408 = vst [vmem:[#allocation18] sm:$0xff] %v1406
    %1409 = vst [vmem:[#allocation18 + $0x8] sm:$0xff] %v1407
    // Predicated region
    $region104: #{tpu_custom_call.1} parent=1 // pred_check
      _
    $region105: #{tpu_custom_call.1} parent=1 // pred_check_branch
      %1411 = sbr.rel (0) target = $region107
    $region106: #{tpu_custom_call.1} parent=1 // pred_region
      %s1413 = ssub.s32 256, 256
      %1414 = vsyncadd [#allocation6], %s1413
      %s1415 = sshll.u32 [#allocation18], 4
      %s1416 = int_to_ptr.vmem [resolvable:$true] %s1415
      %1421 = dma.vmem_to_hbm [thread:$0]  %s1416, 256, %s14, [#allocation6], 128, 128, 8
    $region107: #{tpu_custom_call.1} parent=1 // pred_fallthru
      _
    // Predicated region
    $region108: #{tpu_custom_call.1} parent=1 // pred_check
      _
    $region109: #{tpu_custom_call.1} parent=1 // pred_check_branch
      %1423 = sbr.rel (0) target = $region111
    $region110: #{tpu_custom_call.1} parent=1 // pred_region
      %1424 = dma.done [#allocation6], 256
    $region111: #{tpu_custom_call.1} parent=1 // pred_fallthru
      _
    %1425 = vsyncpa [#allocation5], 1
    %1426 = vsyncpa [#allocation9], 1
    %1427 = vsyncpa [#allocation13], 1
    %1428 = vsyncpa [#allocation16], 1
    %1429 = vsyncpa [#allocation6], 1
    %1430 = vsyncpa [#allocation7], 1

</llo_original>
